<compile_context>
chip_gen: v5e
topology: v5e:2x2
jax: 0.10.0
libtpu: 0.0.40
codegen_flags: <defaults>
</compile_context>

<pallas_src>
import functools

import jax
import jax.numpy as jnp
from jax.experimental import pallas as pl
from jax.experimental.pallas import tpu as pltpu


# -----------------------------------------------------------------------------
# Pallas kernel: full encoder stack; grid = (batch, layer), x carried in VMEM
# -----------------------------------------------------------------------------
def encoder_stack_kernel(
    x_ref, bias_ref,
    wqkv_ref, bqkv_ref, wo_ref, bo_ref,
    ln1g_ref, ln1b_ref,
    w1_ref, b1_ref, w2_ref, b2_ref,
    ln2g_ref, ln2b_ref,
    o_ref,
    x_scr, q_scr, k_scr, v_scr, ctx_scr,
    *, num_heads,
):
    layer = pl.program_id(1)

    # Layer 0 of every batch element: load the embedding output into the VMEM carry.
    @pl.when(layer == 0)
    def _():
        x_scr[...] = x_ref[0]

    x = x_scr[...]                    # [T, D] f32, resident across the layer axis
    T, D = x.shape
    H = num_heads
    dh = D // H

    x_bf = x.astype(jnp.bfloat16)

    # --- fused QKV projection (1/sqrt(dh) pre-folded into Wq / bq host-side) -------
    qkv = jnp.dot(x_bf, wqkv_ref[0], preferred_element_type=jnp.float32)
    qkv = qkv + bqkv_ref[0]                                     # [T, 3D] f32

    # Split into per-head [H, T, dh] tensors via static lane-slice stores into VMEM
    # scratch (no reshape/transpose/concatenate).
    for h in range(H):
        q_scr[h] = qkv[:, h * dh:(h + 1) * dh].astype(jnp.bfloat16)
        k_scr[h] = qkv[:, D + h * dh:D + (h + 1) * dh].astype(jnp.bfloat16)
        v_scr[h] = qkv[:, 2 * D + h * dh:2 * D + (h + 1) * dh].astype(jnp.bfloat16)

    q = q_scr[...]                    # [H, T, dh] bf16
    k = k_scr[...]
    v = v_scr[...]

    # --- biased softmax attention, all heads batched (MXU, f32 accumulate) --------
    s = jnp.einsum('hqd,hkd->hqk', q, k, preferred_element_type=jnp.float32)
    s = s + bias_ref[0]               # bf16 bias (key-padding mask already folded in)
    m = jnp.max(s, axis=-1, keepdims=True)
    p = jnp.exp(s - m)                # unnormalized probabilities
    l_sum = jnp.sum(p, axis=-1, keepdims=True)
    ctx = jnp.einsum('hqk,hkd->hqd', p.astype(jnp.bfloat16), v,
                     preferred_element_type=jnp.float32)        # [H, T, dh] f32
    ctx = ctx * pl.reciprocal(l_sum, approx=True)   # normalize after PV (EUP recip)

    # back to [T, D] via lane-slice stores into a VMEM scratch (no concatenate)
    for h in range(H):
        ctx_scr[:, h * dh:(h + 1) * dh] = ctx[h].astype(jnp.bfloat16)

    attn_out = jnp.dot(ctx_scr[...], wo_ref[0],
                       preferred_element_type=jnp.float32) + bo_ref[0]

    # --- residual + LayerNorm 1 (post-LN, f32) -------------------------------------
    y = x + attn_out
    mu = jnp.mean(y, axis=-1, keepdims=True)
    var = jnp.mean((y - mu) ** 2, axis=-1, keepdims=True)
    y = (y - mu) * jax.lax.rsqrt(var + 1e-5) * ln1g_ref[0] + ln1b_ref[0]

    # --- feed-forward (bf16 matmuls, f32 accumulate) -------------------------------
    # TODO(synk): PyTorch gelu is exact (erf); tanh approximation used here.
    # TODO(synk): chunk the FFN over F with a VMEM accumulator for very large FFN dims.
    hdn = jnp.dot(y.astype(jnp.bfloat16), w1_ref[0],
                  preferred_element_type=jnp.float32) + b1_ref[0]
    hdn = jax.nn.gelu(hdn, approximate=True)
    ff = jnp.dot(hdn.astype(jnp.bfloat16), w2_ref[0],
                 preferred_element_type=jnp.float32) + b2_ref[0]

    # --- residual + LayerNorm 2 -----------------------------------------------------
    z = y + ff
    mu2 = jnp.mean(z, axis=-1, keepdims=True)
    var2 = jnp.mean((z - mu2) ** 2, axis=-1, keepdims=True)
    z = (z - mu2) * jax.lax.rsqrt(var2 + 1e-5) * ln2g_ref[0] + ln2b_ref[0]

    x_scr[...] = z      # carry to the next layer (stays in VMEM)
    o_ref[0, 0] = z     # emit this layer's inner state


def run_encoder_stack(x, bias_bf16, stacked, num_heads,
                      vmem_limit_bytes=48 * 1024 * 1024):
    """x: [B,T,D] f32, bias_bf16: [B,H,T,T] bf16 (mask folded in),
    stacked: per-layer params stacked along a leading L axis.
    Returns all per-layer states [B, L, T, D] f32."""
    B, T, D = x.shape
    H = num_heads
    L = stacked["wqkv"].shape[0]
    dh = D // H

    def per_layer_spec(arr):
        # weight blocked along the leading layer axis; full extent elsewhere
        zeros = (0,) * (arr.ndim - 1)
        return pl.BlockSpec((1,) + arr.shape[1:], lambda b, l: (l,) + zeros)

    in_specs = [
        pl.BlockSpec((1, T, D), lambda b, l: (b, 0, 0)),          # x (layer-0 input)
        pl.BlockSpec((1, H, T, T), lambda b, l: (b, 0, 0, 0)),    # bias (resident per b)
        per_layer_spec(stacked["wqkv"]), per_layer_spec(stacked["bqkv"]),
        per_layer_spec(stacked["wo"]),   per_layer_spec(stacked["bo"]),
        per_layer_spec(stacked["ln1_g"]), per_layer_spec(stacked["ln1_b"]),
        per_layer_spec(stacked["w1"]),   per_layer_spec(stacked["b1"]),
        per_layer_spec(stacked["w2"]),   per_layer_spec(stacked["b2"]),
        per_layer_spec(stacked["ln2_g"]), per_layer_spec(stacked["ln2_b"]),
    ]

    # TODO(synk): for v7x with B==1 (or odd B), add a second "parallel" grid axis
    # over query-row tiles so both TensorCores are used.
    return pl.pallas_call(
        functools.partial(encoder_stack_kernel, num_heads=H),
        out_shape=jax.ShapeDtypeStruct((B, L, T, D), jnp.float32),
        grid=(B, L),
        in_specs=in_specs,
        out_specs=pl.BlockSpec((1, 1, T, D), lambda b, l: (b, l, 0, 0)),
        scratch_shapes=[
            pltpu.VMEM((T, D), jnp.float32),        # x carry across layers
            pltpu.VMEM((H, T, dh), jnp.bfloat16),   # q  (per-head layout)
            pltpu.VMEM((H, T, dh), jnp.bfloat16),   # k
            pltpu.VMEM((H, T, dh), jnp.bfloat16),   # v
            pltpu.VMEM((T, D), jnp.bfloat16),       # ctx (heads re-merged)
        ],
        compiler_params=pltpu.CompilerParams(
            dimension_semantics=("parallel", "arbitrary"),
            vmem_limit_bytes=vmem_limit_bytes,
        ),
    )(
        x, bias_bf16,
        stacked["wqkv"], stacked["bqkv"], stacked["wo"], stacked["bo"],
        stacked["ln1_g"], stacked["ln1_b"],
        stacked["w1"], stacked["b1"], stacked["w2"], stacked["b2"],
        stacked["ln2_g"], stacked["ln2_b"],
    )


# -----------------------------------------------------------------------------
# Plain-JAX glue (embedding gathers / bias assembly), mirroring the module
# -----------------------------------------------------------------------------
def graph_entities_feature(data_x, indeg, outdeg, emb):
    """LocalLevelEncoding: sum of entity-feature embeddings + degree embeddings,
    prepend graph (CLS) token.  -> [B, T, D]"""
    # TODO(synk): `link`/`length` path encoding omitted (submodule source unavailable).
    node = jnp.take(emb["entity_embed"], data_x, axis=0).sum(axis=-2)       # [B,N,D]
    node = node + jnp.take(emb["in_deg_embed"], indeg, axis=0)
    node = node + jnp.take(emb["out_deg_embed"], outdeg, axis=0)
    B = data_x.shape[0]
    cls = jnp.broadcast_to(emb["graph_token"][None, :, :], (B, 1, node.shape[-1]))
    return jnp.concatenate([cls, node], axis=1)


def graph_attn_bias_fn(attn_bias, spatial_pos, emb, num_heads):
    """GlobalLevelEncoding: spatial-position bias + graph-token virtual distance,
    added on top of the externally supplied attn_bias.  -> [B, H, T, T]"""
    B, T, _ = attn_bias.shape
    gab = jnp.broadcast_to(attn_bias[:, None, :, :], (B, num_heads, T, T))
    sp = jnp.take(emb["spatial_embed"], spatial_pos, axis=0)     # [B,N,N,H]
    sp = jnp.transpose(sp, (0, 3, 1, 2))                         # [B,H,N,N]
    gab = gab.at[:, :, 1:, 1:].add(sp)
    t = emb["virtual_dist"].reshape(1, num_heads, 1)
    gab = gab.at[:, :, 1:, 0].add(t)
    gab = gab.at[:, :, 0, :].add(t)
    # TODO(synk): multi-hop edge_input encoding omitted (GlobalLevelEncoding source unavailable).
    gab = gab + attn_bias[:, None, :, :]
    return gab


def prepare_layer_params(p, num_heads):
    """Host-side, one-time: fuse QKV, fold softmax scale into Wq/bq, cast MXU weights bf16."""
    D = p["wq"].shape[0]
    dh = D // num_heads
    scale = jnp.float32(dh) ** -0.5
    wqkv = jnp.concatenate([p["wq"] * scale, p["wk"], p["wv"]], axis=1).astype(jnp.bfloat16)
    bqkv = jnp.concatenate([p["bq"] * scale, p["bk"], p["bv"]], axis=1).astype(jnp.float32)
    return dict(
        wqkv=wqkv, bqkv=bqkv,
        wo=p["wo"].astype(jnp.bfloat16), bo=p["bo"],
        ln1_g=p["ln1_g"], ln1_b=p["ln1_b"],
        w1=p["w1"].astype(jnp.bfloat16), b1=p["b1"],
        w2=p["w2"].astype(jnp.bfloat16), b2=p["b2"],
        ln2_g=p["ln2_g"], ln2_b=p["ln2_b"],
    )


def prepare_stacked_params(layer_params, num_heads):
    """Stack all layers' prepared params along a leading L axis (one-time, host-side)."""
    prepped = [prepare_layer_params(p, num_heads) for p in layer_params]
    return {k: jnp.stack([lp[k] for lp in prepped], axis=0) for k in prepped[0]}


def structure_aware_graph_encoder_forward(
    data_x, indeg, outdeg, spatial_pos, attn_bias, edge_input, link, length,
    emb, layer_params, num_heads,
):
    B, N = data_x.shape[:2]
    T = N + 1
    L = len(layer_params)

    # key padding mask (CLS never padded), 1.0 where the key position is padding
    pad_keys = (data_x[:, :, 0] == 0).astype(jnp.float32)                       # [B,N]
    pad_keys = jnp.concatenate([jnp.zeros((B, 1), jnp.float32), pad_keys], 1)   # [B,T]

    x = graph_entities_feature(data_x, indeg, outdeg, emb)                      # [B,T,D]
    bias = graph_attn_bias_fn(attn_bias, spatial_pos, emb, num_heads)           # [B,H,T,T]

    # Pad T to a sublane multiple (8).  Padded positions are masked out as keys
    # via the bias and sliced off before returning (their query rows are discarded).
    T_pad = ((T + 7) // 8) * 8
    dt = T_pad - T
    if dt:
        x = jnp.pad(x, ((0, 0), (0, dt), (0, 0)))
        bias = jnp.pad(bias, ((0, 0), (0, 0), (0, dt), (0, dt)))
        pad_keys = jnp.pad(pad_keys, ((0, 0), (0, dt)), constant_values=1.0)

    # Fold the key-padding mask into the bias ONCE (shared by every layer), store bf16.
    bias = bias + pad_keys[:, None, None, :] * jnp.float32(-1e30)
    bias_bf16 = bias.astype(jnp.bfloat16)

    stacked = prepare_stacked_params(layer_params, num_heads)

    # One fused pallas_call for the whole stack: activations stay in VMEM across layers.
    # embed_scale=None, quant_noise=None, emb_layer_norm=None, dropout=eval-identity
    all_states = run_encoder_stack(x, bias_bf16, stacked, num_heads)   # [B, L, T_pad, D]

    inner_states = [jnp.transpose(x[:, :T, :], (1, 0, 2))]
    for l in range(L):
        inner_states.append(jnp.transpose(all_states[:, l, :T, :], (1, 0, 2)))

    x_tbd = inner_states[-1]                        # [T, B, D]
    graph_rep = x_tbd[0, :, :]                      # [B, D]
    return inner_states, graph_rep


# -----------------------------------------------------------------------------
# Deterministic parameter construction
# -----------------------------------------------------------------------------
def _normal(key, shape, std=0.02):
    return std * jax.random.normal(key, shape, dtype=jnp.float32)


def make_embed_params(key, num_entities, num_in_deg, num_out_deg, num_spatial, D, H):
    ks = jax.random.split(key, 6)
    return dict(
        entity_embed=_normal(ks[0], (num_entities, D)).at[0].set(0.0),   # padding_idx=0
        in_deg_embed=_normal(ks[1], (num_in_deg, D)).at[0].set(0.0),
        out_deg_embed=_normal(ks[2], (num_out_deg, D)).at[0].set(0.0),
        graph_token=_normal(ks[3], (1, D)),
        spatial_embed=_normal(ks[4], (num_spatial, H)).at[0].set(0.0),
        virtual_dist=_normal(ks[5], (1, H)),
    )


def make_layer_params(key, D, F):
    ks = jax.random.split(key, 6)
    # weights stored pre-transposed as [in, out]  (PyTorch Linear does x @ W.T)
    return dict(
        wq=_normal(ks[0], (D, D)), bq=jnp.zeros((1, D), jnp.float32),
        wk=_normal(ks[1], (D, D)), bk=jnp.zeros((1, D), jnp.float32),
        wv=_normal(ks[2], (D, D)), bv=jnp.zeros((1, D), jnp.float32),
        wo=_normal(ks[3], (D, D)), bo=jnp.zeros((1, D), jnp.float32),
        ln1_g=jnp.ones((1, D), jnp.float32), ln1_b=jnp.zeros((1, D), jnp.float32),
        w1=_normal(ks[4], (D, F)), b1=jnp.zeros((1, F), jnp.float32),
        w2=_normal(ks[5], (F, D)), b2=jnp.zeros((1, D), jnp.float32),
        ln2_g=jnp.ones((1, D), jnp.float32), ln2_b=jnp.zeros((1, D), jnp.float32),
    )


# -----------------------------------------------------------------------------
if __name__ == "__main__":
    key = jax.random.PRNGKey(0)

    # small, shape-consistent config
    B, N, Ffeat = 2, 8, 3
    D, H, FFN, L = 32, 4, 32, 2
    num_entities, num_in_deg, num_out_deg = 64, 16, 16
    num_spatial, multi_hop_max_dist = 16, 5
    T = N + 1

    k_emb, k_layers, k_data = jax.random.split(key, 3)
    emb = make_embed_params(k_emb, num_entities, num_in_deg, num_out_deg, num_spatial, D, H)
    layer_keys = jax.random.split(k_layers, L)
    layer_params = [make_layer_params(layer_keys[i], D, FFN) for i in range(L)]

    kd = jax.random.split(k_data, 8)
    data_x = jax.random.randint(kd[0], (B, N, Ffeat), 1, num_entities, dtype=jnp.int32)
    data_x = data_x.at[1, 6:, :].set(0)  # make last two entities of graph 1 padding
    indeg = jax.random.randint(kd[1], (B, N), 0, num_in_deg, dtype=jnp.int32)
    outdeg = jax.random.randint(kd[2], (B, N), 0, num_out_deg, dtype=jnp.int32)
    spatial_pos = jax.random.randint(kd[3], (B, N, N), 0, num_spatial, dtype=jnp.int32)
    attn_bias = jnp.zeros((B, T, T), jnp.float32)
    edge_input = jnp.zeros((B, N, N, multi_hop_max_dist, 1), jnp.int32)  # unused (TODO above)
    link = jnp.zeros((B, N), jnp.int32)      # unused (TODO above)
    length = jnp.zeros((B,), jnp.int32)      # unused (TODO above)

    inner_states, graph_rep = structure_aware_graph_encoder_forward(
        data_x, indeg, outdeg, spatial_pos, attn_bias, edge_input, link, length,
        emb, layer_params, H,
    )

    last = jax.block_until_ready(inner_states[-1])   # [T, B, D]
    graph_rep = jax.block_until_ready(graph_rep)     # [B, D]
    assert len(inner_states) == L + 1
    assert last.shape == (T, B, D) and graph_rep.shape == (B, D)
    assert bool(jnp.all(jnp.isfinite(last))) and bool(jnp.all(jnp.isfinite(graph_rep)))
    print("KERNEL_OK")
</pallas_src>

<mosaic_0001>
module attributes {stable_mosaic.version = 11 : i64} {
  func.func @encoder_stack_kernel(%arg0: i32, %arg1: i32, %arg2: memref<1x16x32xf32, #tpu.memory_space<vmem>>, %arg3: memref<1x4x16x16xbf16, #tpu.memory_space<vmem>>, %arg4: memref<1x32x96xbf16, #tpu.memory_space<vmem>>, %arg5: memref<1x1x96xf32, #tpu.memory_space<vmem>>, %arg6: memref<1x32x32xbf16, #tpu.memory_space<vmem>>, %arg7: memref<1x1x32xf32, #tpu.memory_space<vmem>>, %arg8: memref<1x1x32xf32, #tpu.memory_space<vmem>>, %arg9: memref<1x1x32xf32, #tpu.memory_space<vmem>>, %arg10: memref<1x32x32xbf16, #tpu.memory_space<vmem>>, %arg11: memref<1x1x32xf32, #tpu.memory_space<vmem>>, %arg12: memref<1x32x32xbf16, #tpu.memory_space<vmem>>, %arg13: memref<1x1x32xf32, #tpu.memory_space<vmem>>, %arg14: memref<1x1x32xf32, #tpu.memory_space<vmem>>, %arg15: memref<1x1x32xf32, #tpu.memory_space<vmem>>, %arg16: memref<1x1x16x32xf32, #tpu.memory_space<vmem>>, %arg17: memref<16x32xf32, #tpu.memory_space<vmem>>, %arg18: memref<4x16x8xbf16, #tpu.memory_space<vmem>>, %arg19: memref<4x16x8xbf16, #tpu.memory_space<vmem>>, %arg20: memref<4x16x8xbf16, #tpu.memory_space<vmem>>, %arg21: memref<16x32xbf16, #tpu.memory_space<vmem>>) attributes {dimension_semantics = [#tpu.dimension_semantics<parallel>, #tpu.dimension_semantics<arbitrary>], iteration_bounds = array<i64: 2, 2>, scalar_prefetch = 0 : i64, scratch_operands = 5 : i64, tpu.core_type = #tpu.core_type<tc>, window_params = [{transform_indices = @transform_0, window_bounds = array<i64: 1, 16, 32>}, {transform_indices = @transform_1, window_bounds = array<i64: 1, 4, 16, 16>}, {transform_indices = @transform_2, window_bounds = array<i64: 1, 32, 96>}, {transform_indices = @transform_3, window_bounds = array<i64: 1, 1, 96>}, {transform_indices = @transform_4, window_bounds = array<i64: 1, 32, 32>}, {transform_indices = @transform_5, window_bounds = array<i64: 1, 1, 32>}, {transform_indices = @transform_6, window_bounds = array<i64: 1, 1, 32>}, {transform_indices = @transform_7, window_bounds = array<i64: 1, 1, 32>}, {transform_indices = @transform_8, window_bounds = array<i64: 1, 32, 32>}, {transform_indices = @transform_9, window_bounds = array<i64: 1, 1, 32>}, {transform_indices = @transform_10, window_bounds = array<i64: 1, 32, 32>}, {transform_indices = @transform_11, window_bounds = array<i64: 1, 1, 32>}, {transform_indices = @transform_12, window_bounds = array<i64: 1, 1, 32>}, {transform_indices = @transform_13, window_bounds = array<i64: 1, 1, 32>}, {transform_indices = @transform_14, window_bounds = array<i64: 1, 1, 16, 32>}]} {
    %c0_i32 = arith.constant 0 : i32
    %0 = arith.cmpi eq, %arg1, %c0_i32 : i32
    %1 = arith.extui %0 : i1 to i32
    %c0_i32_0 = arith.constant 0 : i32
    %2 = arith.cmpi ne, %1, %c0_i32_0 : i32
    scf.if %2 {
      %c0_118 = arith.constant 0 : index
      %c0_119 = arith.constant 0 : index
      %c0_120 = arith.constant 0 : index
      %203 = vector.load %arg2[%c0_118, %c0_119, %c0_120] : memref<1x16x32xf32, #tpu.memory_space<vmem>>, vector<1x16x32xf32>
      %204 = vector.shape_cast %203 : vector<1x16x32xf32> to vector<16x32xf32>
      %c0_121 = arith.constant 0 : index
      %c0_122 = arith.constant 0 : index
      %205 = vector.load %arg17[%c0_121, %c0_122] : memref<16x32xf32, #tpu.memory_space<vmem>>, vector<16x32xf32>
      tpu.vector_store %arg17[%c0_121, %c0_122], %204 {strides = array<i32>} : memref<16x32xf32, #tpu.memory_space<vmem>>, vector<16x32xf32>,
    } else {
    }
    %c0 = arith.constant 0 : index
    %c0_1 = arith.constant 0 : index
    %3 = vector.load %arg17[%c0, %c0_1] : memref<16x32xf32, #tpu.memory_space<vmem>>, vector<16x32xf32>
    %4 = arith.truncf %3 : vector<16x32xf32> to vector<16x32xbf16>
    %c0_2 = arith.constant 0 : index
    %c0_3 = arith.constant 0 : index
    %c0_4 = arith.constant 0 : index
    %5 = vector.load %arg4[%c0_2, %c0_3, %c0_4] : memref<1x32x96xbf16, #tpu.memory_space<vmem>>, vector<1x32x96xbf16>
    %6 = vector.shape_cast %5 : vector<1x32x96xbf16> to vector<32x96xbf16>
    %cst = arith.constant dense<0.000000e+00> : vector<16x96xf32>
    %7 = tpu.matmul %4, %6, %cst {dimension_numbers = #tpu.dot_dimension_numbers<[1], [0], [0], [1], [0, 0, 1, 1], [], []>} : vector<16x32xbf16>, vector<32x96xbf16>, vector<16x96xf32> -> vector<16x96xf32>
    %c0_5 = arith.constant 0 : index
    %c0_6 = arith.constant 0 : index
    %c0_7 = arith.constant 0 : index
    %8 = vector.load %arg5[%c0_5, %c0_6, %c0_7] : memref<1x1x96xf32, #tpu.memory_space<vmem>>, vector<1x1x96xf32>
    %9 = vector.shape_cast %8 : vector<1x1x96xf32> to vector<1x96xf32>
    %10 = vector.broadcast %9 : vector<1x96xf32> to vector<16x96xf32>
    %11 = arith.addf %7, %10 : vector<16x96xf32>
    %12 = vector.extract_strided_slice %11 {offsets = [0, 0], sizes = [16, 8], strides = [1, 1]} : vector<16x96xf32> to vector<16x8xf32>
    %13 = arith.truncf %12 : vector<16x8xf32> to vector<16x8xbf16>
    %c0_8 = arith.constant 0 : index
    %c0_9 = arith.constant 0 : index
    %c0_10 = arith.constant 0 : index
    %14 = vector.load %arg18[%c0_8, %c0_9, %c0_10] : memref<4x16x8xbf16, #tpu.memory_space<vmem>>, vector<1x16x8xbf16>
    %15 = vector.shape_cast %14 : vector<1x16x8xbf16> to vector<16x8xbf16>
    %16 = vector.shape_cast %13 : vector<16x8xbf16> to vector<1x16x8xbf16>
    tpu.vector_store %arg18[%c0_8, %c0_9, %c0_10], %16 {strides = array<i32>} : memref<4x16x8xbf16, #tpu.memory_space<vmem>>, vector<1x16x8xbf16>,
    %17 = vector.extract_strided_slice %11 {offsets = [0, 32], sizes = [16, 8], strides = [1, 1]} : vector<16x96xf32> to vector<16x8xf32>
    %18 = arith.truncf %17 : vector<16x8xf32> to vector<16x8xbf16>
    %c0_11 = arith.constant 0 : index
    %c0_12 = arith.constant 0 : index
    %c0_13 = arith.constant 0 : index
    %19 = vector.load %arg19[%c0_11, %c0_12, %c0_13] : memref<4x16x8xbf16, #tpu.memory_space<vmem>>, vector<1x16x8xbf16>
    %20 = vector.shape_cast %19 : vector<1x16x8xbf16> to vector<16x8xbf16>
    %21 = vector.shape_cast %18 : vector<16x8xbf16> to vector<1x16x8xbf16>
    tpu.vector_store %arg19[%c0_11, %c0_12, %c0_13], %21 {strides = array<i32>} : memref<4x16x8xbf16, #tpu.memory_space<vmem>>, vector<1x16x8xbf16>,
    %22 = vector.extract_strided_slice %11 {offsets = [0, 64], sizes = [16, 8], strides = [1, 1]} : vector<16x96xf32> to vector<16x8xf32>
    %23 = arith.truncf %22 : vector<16x8xf32> to vector<16x8xbf16>
    %c0_14 = arith.constant 0 : index
    %c0_15 = arith.constant 0 : index
    %c0_16 = arith.constant 0 : index
    %24 = vector.load %arg20[%c0_14, %c0_15, %c0_16] : memref<4x16x8xbf16, #tpu.memory_space<vmem>>, vector<1x16x8xbf16>
    %25 = vector.shape_cast %24 : vector<1x16x8xbf16> to vector<16x8xbf16>
    %26 = vector.shape_cast %23 : vector<16x8xbf16> to vector<1x16x8xbf16>
    tpu.vector_store %arg20[%c0_14, %c0_15, %c0_16], %26 {strides = array<i32>} : memref<4x16x8xbf16, #tpu.memory_space<vmem>>, vector<1x16x8xbf16>,
    %27 = vector.extract_strided_slice %11 {offsets = [0, 8], sizes = [16, 8], strides = [1, 1]} : vector<16x96xf32> to vector<16x8xf32>
    %28 = arith.truncf %27 : vector<16x8xf32> to vector<16x8xbf16>
    %c1 = arith.constant 1 : index
    %c0_17 = arith.constant 0 : index
    %c0_18 = arith.constant 0 : index
    %29 = vector.load %arg18[%c1, %c0_17, %c0_18] : memref<4x16x8xbf16, #tpu.memory_space<vmem>>, vector<1x16x8xbf16>
    %30 = vector.shape_cast %29 : vector<1x16x8xbf16> to vector<16x8xbf16>
    %31 = vector.shape_cast %28 : vector<16x8xbf16> to vector<1x16x8xbf16>
    tpu.vector_store %arg18[%c1, %c0_17, %c0_18], %31 {strides = array<i32>} : memref<4x16x8xbf16, #tpu.memory_space<vmem>>, vector<1x16x8xbf16>,
    %32 = vector.extract_strided_slice %11 {offsets = [0, 40], sizes = [16, 8], strides = [1, 1]} : vector<16x96xf32> to vector<16x8xf32>
    %33 = arith.truncf %32 : vector<16x8xf32> to vector<16x8xbf16>
    %c1_19 = arith.constant 1 : index
    %c0_20 = arith.constant 0 : index
    %c0_21 = arith.constant 0 : index
    %34 = vector.load %arg19[%c1_19, %c0_20, %c0_21] : memref<4x16x8xbf16, #tpu.memory_space<vmem>>, vector<1x16x8xbf16>
    %35 = vector.shape_cast %34 : vector<1x16x8xbf16> to vector<16x8xbf16>
    %36 = vector.shape_cast %33 : vector<16x8xbf16> to vector<1x16x8xbf16>
    tpu.vector_store %arg19[%c1_19, %c0_20, %c0_21], %36 {strides = array<i32>} : memref<4x16x8xbf16, #tpu.memory_space<vmem>>, vector<1x16x8xbf16>,
    %37 = vector.extract_strided_slice %11 {offsets = [0, 72], sizes = [16, 8], strides = [1, 1]} : vector<16x96xf32> to vector<16x8xf32>
    %38 = arith.truncf %37 : vector<16x8xf32> to vector<16x8xbf16>
    %c1_22 = arith.constant 1 : index
    %c0_23 = arith.constant 0 : index
    %c0_24 = arith.constant 0 : index
    %39 = vector.load %arg20[%c1_22, %c0_23, %c0_24] : memref<4x16x8xbf16, #tpu.memory_space<vmem>>, vector<1x16x8xbf16>
    %40 = vector.shape_cast %39 : vector<1x16x8xbf16> to vector<16x8xbf16>
    %41 = vector.shape_cast %38 : vector<16x8xbf16> to vector<1x16x8xbf16>
    tpu.vector_store %arg20[%c1_22, %c0_23, %c0_24], %41 {strides = array<i32>} : memref<4x16x8xbf16, #tpu.memory_space<vmem>>, vector<1x16x8xbf16>,
    %42 = vector.extract_strided_slice %11 {offsets = [0, 16], sizes = [16, 8], strides = [1, 1]} : vector<16x96xf32> to vector<16x8xf32>
    %43 = arith.truncf %42 : vector<16x8xf32> to vector<16x8xbf16>
    %c2 = arith.constant 2 : index
    %c0_25 = arith.constant 0 : index
    %c0_26 = arith.constant 0 : index
    %44 = vector.load %arg18[%c2, %c0_25, %c0_26] : memref<4x16x8xbf16, #tpu.memory_space<vmem>>, vector<1x16x8xbf16>
    %45 = vector.shape_cast %44 : vector<1x16x8xbf16> to vector<16x8xbf16>
    %46 = vector.shape_cast %43 : vector<16x8xbf16> to vector<1x16x8xbf16>
    tpu.vector_store %arg18[%c2, %c0_25, %c0_26], %46 {strides = array<i32>} : memref<4x16x8xbf16, #tpu.memory_space<vmem>>, vector<1x16x8xbf16>,
    %47 = vector.extract_strided_slice %11 {offsets = [0, 48], sizes = [16, 8], strides = [1, 1]} : vector<16x96xf32> to vector<16x8xf32>
    %48 = arith.truncf %47 : vector<16x8xf32> to vector<16x8xbf16>
    %c2_27 = arith.constant 2 : index
    %c0_28 = arith.constant 0 : index
    %c0_29 = arith.constant 0 : index
    %49 = vector.load %arg19[%c2_27, %c0_28, %c0_29] : memref<4x16x8xbf16, #tpu.memory_space<vmem>>, vector<1x16x8xbf16>
    %50 = vector.shape_cast %49 : vector<1x16x8xbf16> to vector<16x8xbf16>
    %51 = vector.shape_cast %48 : vector<16x8xbf16> to vector<1x16x8xbf16>
    tpu.vector_store %arg19[%c2_27, %c0_28, %c0_29], %51 {strides = array<i32>} : memref<4x16x8xbf16, #tpu.memory_space<vmem>>, vector<1x16x8xbf16>,
    %52 = vector.extract_strided_slice %11 {offsets = [0, 80], sizes = [16, 8], strides = [1, 1]} : vector<16x96xf32> to vector<16x8xf32>
    %53 = arith.truncf %52 : vector<16x8xf32> to vector<16x8xbf16>
    %c2_30 = arith.constant 2 : index
    %c0_31 = arith.constant 0 : index
    %c0_32 = arith.constant 0 : index
    %54 = vector.load %arg20[%c2_30, %c0_31, %c0_32] : memref<4x16x8xbf16, #tpu.memory_space<vmem>>, vector<1x16x8xbf16>
    %55 = vector.shape_cast %54 : vector<1x16x8xbf16> to vector<16x8xbf16>
    %56 = vector.shape_cast %53 : vector<16x8xbf16> to vector<1x16x8xbf16>
    tpu.vector_store %arg20[%c2_30, %c0_31, %c0_32], %56 {strides = array<i32>} : memref<4x16x8xbf16, #tpu.memory_space<vmem>>, vector<1x16x8xbf16>,
    %57 = vector.extract_strided_slice %11 {offsets = [0, 24], sizes = [16, 8], strides = [1, 1]} : vector<16x96xf32> to vector<16x8xf32>
    %58 = arith.truncf %57 : vector<16x8xf32> to vector<16x8xbf16>
    %c3 = arith.constant 3 : index
    %c0_33 = arith.constant 0 : index
    %c0_34 = arith.constant 0 : index
    %59 = vector.load %arg18[%c3, %c0_33, %c0_34] : memref<4x16x8xbf16, #tpu.memory_space<vmem>>, vector<1x16x8xbf16>
    %60 = vector.shape_cast %59 : vector<1x16x8xbf16> to vector<16x8xbf16>
    %61 = vector.shape_cast %58 : vector<16x8xbf16> to vector<1x16x8xbf16>
    tpu.vector_store %arg18[%c3, %c0_33, %c0_34], %61 {strides = array<i32>} : memref<4x16x8xbf16, #tpu.memory_space<vmem>>, vector<1x16x8xbf16>,
    %62 = vector.extract_strided_slice %11 {offsets = [0, 56], sizes = [16, 8], strides = [1, 1]} : vector<16x96xf32> to vector<16x8xf32>
    %63 = arith.truncf %62 : vector<16x8xf32> to vector<16x8xbf16>
    %c3_35 = arith.constant 3 : index
    %c0_36 = arith.constant 0 : index
    %c0_37 = arith.constant 0 : index
    %64 = vector.load %arg19[%c3_35, %c0_36, %c0_37] : memref<4x16x8xbf16, #tpu.memory_space<vmem>>, vector<1x16x8xbf16>
    %65 = vector.shape_cast %64 : vector<1x16x8xbf16> to vector<16x8xbf16>
    %66 = vector.shape_cast %63 : vector<16x8xbf16> to vector<1x16x8xbf16>
    tpu.vector_store %arg19[%c3_35, %c0_36, %c0_37], %66 {strides = array<i32>} : memref<4x16x8xbf16, #tpu.memory_space<vmem>>, vector<1x16x8xbf16>,
    %67 = vector.extract_strided_slice %11 {offsets = [0, 88], sizes = [16, 8], strides = [1, 1]} : vector<16x96xf32> to vector<16x8xf32>
    %68 = arith.truncf %67 : vector<16x8xf32> to vector<16x8xbf16>
    %c3_38 = arith.constant 3 : index
    %c0_39 = arith.constant 0 : index
    %c0_40 = arith.constant 0 : index
    %69 = vector.load %arg20[%c3_38, %c0_39, %c0_40] : memref<4x16x8xbf16, #tpu.memory_space<vmem>>, vector<1x16x8xbf16>
    %70 = vector.shape_cast %69 : vector<1x16x8xbf16> to vector<16x8xbf16>
    %71 = vector.shape_cast %68 : vector<16x8xbf16> to vector<1x16x8xbf16>
    tpu.vector_store %arg20[%c3_38, %c0_39, %c0_40], %71 {strides = array<i32>} : memref<4x16x8xbf16, #tpu.memory_space<vmem>>, vector<1x16x8xbf16>,
    %c0_41 = arith.constant 0 : index
    %c0_42 = arith.constant 0 : index
    %c0_43 = arith.constant 0 : index
    %72 = vector.load %arg18[%c0_41, %c0_42, %c0_43] : memref<4x16x8xbf16, #tpu.memory_space<vmem>>, vector<4x16x8xbf16>
    %c0_44 = arith.constant 0 : index
    %c0_45 = arith.constant 0 : index
    %c0_46 = arith.constant 0 : index
    %73 = vector.load %arg19[%c0_44, %c0_45, %c0_46] : memref<4x16x8xbf16, #tpu.memory_space<vmem>>, vector<4x16x8xbf16>
    %c0_47 = arith.constant 0 : index
    %c0_48 = arith.constant 0 : index
    %c0_49 = arith.constant 0 : index
    %74 = vector.load %arg20[%c0_47, %c0_48, %c0_49] : memref<4x16x8xbf16, #tpu.memory_space<vmem>>, vector<4x16x8xbf16>
    "tpu.trace_start"() <{level = 10 : i32, message = "hqd,hkd->hqk"}> : () -> ()
    %cst_50 = arith.constant dense<0.000000e+00> : vector<4x16x16xf32>
    %75 = tpu.matmul %72, %73, %cst_50 {dimension_numbers = #tpu.dot_dimension_numbers<[2], [2], [1], [1], [0, 0, 0, 1, 1, 1], [0], [0]>} : vector<4x16x8xbf16>, vector<4x16x8xbf16>, vector<4x16x16xf32> -> vector<4x16x16xf32>
    "tpu.trace_stop"() : () -> ()
    %c0_51 = arith.constant 0 : index
    %c0_52 = arith.constant 0 : index
    %c0_53 = arith.constant 0 : index
    %c0_54 = arith.constant 0 : index
    %76 = vector.load %arg3[%c0_51, %c0_52, %c0_53, %c0_54] : memref<1x4x16x16xbf16, #tpu.memory_space<vmem>>, vector<1x4x16x16xbf16>
    %77 = vector.shape_cast %76 : vector<1x4x16x16xbf16> to vector<4x16x16xbf16>
    %78 = arith.extf %77 : vector<4x16x16xbf16> to vector<4x16x16xf32>
    %79 = arith.addf %75, %78 : vector<4x16x16xf32>
    %cst_55 = arith.constant dense<0xFF800000> : vector<4x16xf32>
    %80 = vector.multi_reduction <maximumf>, %79, %cst_55 [2] : vector<4x16x16xf32> to vector<4x16xf32>
    %81 = vector.shape_cast %80 : vector<4x16xf32> to vector<4x16x1xf32>
    %82 = vector.broadcast %81 : vector<4x16x1xf32> to vector<4x16x16xf32>
    %83 = arith.subf %79, %82 : vector<4x16x16xf32>
    %84 = math.exp %83 : vector<4x16x16xf32>
    %cst_56 = arith.constant dense<0.000000e+00> : vector<4x16xf32>
    %85 = vector.multi_reduction <add>, %84, %cst_56 [2] : vector<4x16x16xf32> to vector<4x16xf32>
    %86 = vector.shape_cast %85 : vector<4x16xf32> to vector<4x16x1xf32>
    %87 = arith.truncf %84 : vector<4x16x16xf32> to vector<4x16x16xbf16>
    "tpu.trace_start"() <{level = 10 : i32, message = "hqk,hkd->hqd"}> : () -> ()
    %cst_57 = arith.constant dense<0.000000e+00> : vector<4x16x8xf32>
    %88 = tpu.matmul %87, %74, %cst_57 {dimension_numbers = #tpu.dot_dimension_numbers<[2], [1], [1], [2], [0, 0, 0, 1, 1, 2], [0], [0]>} : vector<4x16x16xbf16>, vector<4x16x8xbf16>, vector<4x16x8xf32> -> vector<4x16x8xf32>
    "tpu.trace_stop"() : () -> ()
    %89 = tpu.reciprocal %86 {approx = true} : vector<4x16x1xf32> -> vector<4x16x1xf32>
    %90 = vector.broadcast %89 : vector<4x16x1xf32> to vector<4x16x8xf32>
    %91 = arith.mulf %88, %90 : vector<4x16x8xf32>
    %92 = vector.extract_strided_slice %91 {offsets = [0, 0, 0], sizes = [1, 16, 8], strides = [1, 1, 1]} : vector<4x16x8xf32> to vector<1x16x8xf32>
    %93 = vector.shape_cast %92 : vector<1x16x8xf32> to vector<16x8xf32>
    %94 = arith.truncf %93 : vector<16x8xf32> to vector<16x8xbf16>
    %c0_58 = arith.constant 0 : index
    %c0_59 = arith.constant 0 : index
    %95 = vector.load %arg21[%c0_58, %c0_59] : memref<16x32xbf16, #tpu.memory_space<vmem>>, vector<16x8xbf16>
    tpu.vector_store %arg21[%c0_58, %c0_59], %94 {strides = array<i32>} : memref<16x32xbf16, #tpu.memory_space<vmem>>, vector<16x8xbf16>,
    %96 = vector.extract_strided_slice %91 {offsets = [1, 0, 0], sizes = [1, 16, 8], strides = [1, 1, 1]} : vector<4x16x8xf32> to vector<1x16x8xf32>
    %97 = vector.shape_cast %96 : vector<1x16x8xf32> to vector<16x8xf32>
    %98 = arith.truncf %97 : vector<16x8xf32> to vector<16x8xbf16>
    %c0_60 = arith.constant 0 : index
    %c8 = arith.constant 8 : index
    %99 = vector.load %arg21[%c0_60, %c8] : memref<16x32xbf16, #tpu.memory_space<vmem>>, vector<16x8xbf16>
    tpu.vector_store %arg21[%c0_60, %c8], %98 {strides = array<i32>} : memref<16x32xbf16, #tpu.memory_space<vmem>>, vector<16x8xbf16>,
    %100 = vector.extract_strided_slice %91 {offsets = [2, 0, 0], sizes = [1, 16, 8], strides = [1, 1, 1]} : vector<4x16x8xf32> to vector<1x16x8xf32>
    %101 = vector.shape_cast %100 : vector<1x16x8xf32> to vector<16x8xf32>
    %102 = arith.truncf %101 : vector<16x8xf32> to vector<16x8xbf16>
    %c0_61 = arith.constant 0 : index
    %c16 = arith.constant 16 : index
    %103 = vector.load %arg21[%c0_61, %c16] : memref<16x32xbf16, #tpu.memory_space<vmem>>, vector<16x8xbf16>
    tpu.vector_store %arg21[%c0_61, %c16], %102 {strides = array<i32>} : memref<16x32xbf16, #tpu.memory_space<vmem>>, vector<16x8xbf16>,
    %104 = vector.extract_strided_slice %91 {offsets = [3, 0, 0], sizes = [1, 16, 8], strides = [1, 1, 1]} : vector<4x16x8xf32> to vector<1x16x8xf32>
    %105 = vector.shape_cast %104 : vector<1x16x8xf32> to vector<16x8xf32>
    %106 = arith.truncf %105 : vector<16x8xf32> to vector<16x8xbf16>
    %c0_62 = arith.constant 0 : index
    %c24 = arith.constant 24 : index
    %107 = vector.load %arg21[%c0_62, %c24] : memref<16x32xbf16, #tpu.memory_space<vmem>>, vector<16x8xbf16>
    tpu.vector_store %arg21[%c0_62, %c24], %106 {strides = array<i32>} : memref<16x32xbf16, #tpu.memory_space<vmem>>, vector<16x8xbf16>,
    %c0_63 = arith.constant 0 : index
    %c0_64 = arith.constant 0 : index
    %108 = vector.load %arg21[%c0_63, %c0_64] : memref<16x32xbf16, #tpu.memory_space<vmem>>, vector<16x32xbf16>
    %c0_65 = arith.constant 0 : index
    %c0_66 = arith.constant 0 : index
    %c0_67 = arith.constant 0 : index
    %109 = vector.load %arg6[%c0_65, %c0_66, %c0_67] : memref<1x32x32xbf16, #tpu.memory_space<vmem>>, vector<1x32x32xbf16>
    %110 = vector.shape_cast %109 : vector<1x32x32xbf16> to vector<32x32xbf16>
    %cst_68 = arith.constant dense<0.000000e+00> : vector<16x32xf32>
    %111 = tpu.matmul %108, %110, %cst_68 {dimension_numbers = #tpu.dot_dimension_numbers<[1], [0], [0], [1], [0, 0, 1, 1], [], []>} : vector<16x32xbf16>, vector<32x32xbf16>, vector<16x32xf32> -> vector<16x32xf32>
    %c0_69 = arith.constant 0 : index
    %c0_70 = arith.constant 0 : index
    %c0_71 = arith.constant 0 : index
    %112 = vector.load %arg7[%c0_69, %c0_70, %c0_71] : memref<1x1x32xf32, #tpu.memory_space<vmem>>, vector<1x1x32xf32>
    %113 = vector.shape_cast %112 : vector<1x1x32xf32> to vector<1x32xf32>
    %114 = vector.broadcast %113 : vector<1x32xf32> to vector<16x32xf32>
    %115 = arith.addf %111, %114 : vector<16x32xf32>
    %116 = arith.addf %3, %115 : vector<16x32xf32>
    %cst_72 = arith.constant dense<0.000000e+00> : vector<16xf32>
    %117 = vector.multi_reduction <add>, %116, %cst_72 [1] : vector<16x32xf32> to vector<16xf32>
    %118 = vector.shape_cast %117 : vector<16xf32> to vector<16x1xf32>
    %cst_73 = arith.constant 3.200000e+01 : f32
    %119 = vector.broadcast %cst_73 : f32 to vector<16x1xf32>
    %120 = arith.divf %118, %119 : vector<16x1xf32>
    %121 = vector.broadcast %120 : vector<16x1xf32> to vector<16x32xf32>
    %122 = arith.subf %116, %121 : vector<16x32xf32>
    %123 = arith.mulf %122, %122 : vector<16x32xf32>
    %cst_74 = arith.constant dense<0.000000e+00> : vector<16xf32>
    %124 = vector.multi_reduction <add>, %123, %cst_74 [1] : vector<16x32xf32> to vector<16xf32>
    %125 = vector.shape_cast %124 : vector<16xf32> to vector<16x1xf32>
    %cst_75 = arith.constant 3.200000e+01 : f32
    %126 = vector.broadcast %cst_75 : f32 to vector<16x1xf32>
    %127 = arith.divf %125, %126 : vector<16x1xf32>
    %128 = vector.broadcast %120 : vector<16x1xf32> to vector<16x32xf32>
    %129 = arith.subf %116, %128 : vector<16x32xf32>
    %cst_76 = arith.constant 9.99999974E-6 : f32
    %130 = vector.broadcast %cst_76 : f32 to vector<16x1xf32>
    %131 = arith.addf %127, %130 : vector<16x1xf32>
    %132 = math.rsqrt %131 : vector<16x1xf32>
    %133 = vector.broadcast %132 : vector<16x1xf32> to vector<16x32xf32>
    %134 = arith.mulf %129, %133 : vector<16x32xf32>
    %c0_77 = arith.constant 0 : index
    %c0_78 = arith.constant 0 : index
    %c0_79 = arith.constant 0 : index
    %135 = vector.load %arg8[%c0_77, %c0_78, %c0_79] : memref<1x1x32xf32, #tpu.memory_space<vmem>>, vector<1x1x32xf32>
    %136 = vector.shape_cast %135 : vector<1x1x32xf32> to vector<1x32xf32>
    %137 = vector.broadcast %136 : vector<1x32xf32> to vector<16x32xf32>
    %138 = arith.mulf %134, %137 : vector<16x32xf32>
    %c0_80 = arith.constant 0 : index
    %c0_81 = arith.constant 0 : index
    %c0_82 = arith.constant 0 : index
    %139 = vector.load %arg9[%c0_80, %c0_81, %c0_82] : memref<1x1x32xf32, #tpu.memory_space<vmem>>, vector<1x1x32xf32>
    %140 = vector.shape_cast %139 : vector<1x1x32xf32> to vector<1x32xf32>
    %141 = vector.broadcast %140 : vector<1x32xf32> to vector<16x32xf32>
    %142 = arith.addf %138, %141 : vector<16x32xf32>
    %143 = arith.truncf %142 : vector<16x32xf32> to vector<16x32xbf16>
    %c0_83 = arith.constant 0 : index
    %c0_84 = arith.constant 0 : index
    %c0_85 = arith.constant 0 : index
    %144 = vector.load %arg10[%c0_83, %c0_84, %c0_85] : memref<1x32x32xbf16, #tpu.memory_space<vmem>>, vector<1x32x32xbf16>
    %145 = vector.shape_cast %144 : vector<1x32x32xbf16> to vector<32x32xbf16>
    %cst_86 = arith.constant dense<0.000000e+00> : vector<16x32xf32>
    %146 = tpu.matmul %143, %145, %cst_86 {dimension_numbers = #tpu.dot_dimension_numbers<[1], [0], [0], [1], [0, 0, 1, 1], [], []>} : vector<16x32xbf16>, vector<32x32xbf16>, vector<16x32xf32> -> vector<16x32xf32>
    %c0_87 = arith.constant 0 : index
    %c0_88 = arith.constant 0 : index
    %c0_89 = arith.constant 0 : index
    %147 = vector.load %arg11[%c0_87, %c0_88, %c0_89] : memref<1x1x32xf32, #tpu.memory_space<vmem>>, vector<1x1x32xf32>
    %148 = vector.shape_cast %147 : vector<1x1x32xf32> to vector<1x32xf32>
    %149 = vector.broadcast %148 : vector<1x32xf32> to vector<16x32xf32>
    %150 = arith.addf %146, %149 : vector<16x32xf32>
    %151 = arith.mulf %150, %150 : vector<16x32xf32>
    %152 = arith.mulf %150, %151 : vector<16x32xf32>
    %cst_90 = arith.constant 4.471500e-02 : f32
    %153 = vector.broadcast %cst_90 : f32 to vector<16x32xf32>
    %154 = arith.mulf %153, %152 : vector<16x32xf32>
    %155 = arith.addf %150, %154 : vector<16x32xf32>
    %cst_91 = arith.constant 0.797884583 : f32
    %156 = vector.broadcast %cst_91 : f32 to vector<16x32xf32>
    %157 = arith.mulf %156, %155 : vector<16x32xf32>
    %158 = math.tanh %157 : vector<16x32xf32>
    %cst_92 = arith.constant 1.000000e+00 : f32
    %159 = vector.broadcast %cst_92 : f32 to vector<16x32xf32>
    %160 = arith.addf %159, %158 : vector<16x32xf32>
    %cst_93 = arith.constant 5.000000e-01 : f32
    %161 = vector.broadcast %cst_93 : f32 to vector<16x32xf32>
    %162 = arith.mulf %161, %160 : vector<16x32xf32>
    %163 = arith.mulf %150, %162 : vector<16x32xf32>
    %164 = arith.truncf %163 : vector<16x32xf32> to vector<16x32xbf16>
    %c0_94 = arith.constant 0 : index
    %c0_95 = arith.constant 0 : index
    %c0_96 = arith.constant 0 : index
    %165 = vector.load %arg12[%c0_94, %c0_95, %c0_96] : memref<1x32x32xbf16, #tpu.memory_space<vmem>>, vector<1x32x32xbf16>
    %166 = vector.shape_cast %165 : vector<1x32x32xbf16> to vector<32x32xbf16>
    %cst_97 = arith.constant dense<0.000000e+00> : vector<16x32xf32>
    %167 = tpu.matmul %164, %166, %cst_97 {dimension_numbers = #tpu.dot_dimension_numbers<[1], [0], [0], [1], [0, 0, 1, 1], [], []>} : vector<16x32xbf16>, vector<32x32xbf16>, vector<16x32xf32> -> vector<16x32xf32>
    %c0_98 = arith.constant 0 : index
    %c0_99 = arith.constant 0 : index
    %c0_100 = arith.constant 0 : index
    %168 = vector.load %arg13[%c0_98, %c0_99, %c0_100] : memref<1x1x32xf32, #tpu.memory_space<vmem>>, vector<1x1x32xf32>
    %169 = vector.shape_cast %168 : vector<1x1x32xf32> to vector<1x32xf32>
    %170 = vector.broadcast %169 : vector<1x32xf32> to vector<16x32xf32>
    %171 = arith.addf %167, %170 : vector<16x32xf32>
    %172 = arith.addf %142, %171 : vector<16x32xf32>
    %cst_101 = arith.constant dense<0.000000e+00> : vector<16xf32>
    %173 = vector.multi_reduction <add>, %172, %cst_101 [1] : vector<16x32xf32> to vector<16xf32>
    %174 = vector.shape_cast %173 : vector<16xf32> to vector<16x1xf32>
    %cst_102 = arith.constant 3.200000e+01 : f32
    %175 = vector.broadcast %cst_102 : f32 to vector<16x1xf32>
    %176 = arith.divf %174, %175 : vector<16x1xf32>
    %177 = vector.broadcast %176 : vector<16x1xf32> to vector<16x32xf32>
    %178 = arith.subf %172, %177 : vector<16x32xf32>
    %179 = arith.mulf %178, %178 : vector<16x32xf32>
    %cst_103 = arith.constant dense<0.000000e+00> : vector<16xf32>
    %180 = vector.multi_reduction <add>, %179, %cst_103 [1] : vector<16x32xf32> to vector<16xf32>
    %181 = vector.shape_cast %180 : vector<16xf32> to vector<16x1xf32>
    %cst_104 = arith.constant 3.200000e+01 : f32
    %182 = vector.broadcast %cst_104 : f32 to vector<16x1xf32>
    %183 = arith.divf %181, %182 : vector<16x1xf32>
    %184 = vector.broadcast %176 : vector<16x1xf32> to vector<16x32xf32>
    %185 = arith.subf %172, %184 : vector<16x32xf32>
    %cst_105 = arith.constant 9.99999974E-6 : f32
    %186 = vector.broadcast %cst_105 : f32 to vector<16x1xf32>
    %187 = arith.addf %183, %186 : vector<16x1xf32>
    %188 = math.rsqrt %187 : vector<16x1xf32>
    %189 = vector.broadcast %188 : vector<16x1xf32> to vector<16x32xf32>
    %190 = arith.mulf %185, %189 : vector<16x32xf32>
    %c0_106 = arith.constant 0 : index
    %c0_107 = arith.constant 0 : index
    %c0_108 = arith.constant 0 : index
    %191 = vector.load %arg14[%c0_106, %c0_107, %c0_108] : memref<1x1x32xf32, #tpu.memory_space<vmem>>, vector<1x1x32xf32>
    %192 = vector.shape_cast %191 : vector<1x1x32xf32> to vector<1x32xf32>
    %193 = vector.broadcast %192 : vector<1x32xf32> to vector<16x32xf32>
    %194 = arith.mulf %190, %193 : vector<16x32xf32>
    %c0_109 = arith.constant 0 : index
    %c0_110 = arith.constant 0 : index
    %c0_111 = arith.constant 0 : index
    %195 = vector.load %arg15[%c0_109, %c0_110, %c0_111] : memref<1x1x32xf32, #tpu.memory_space<vmem>>, vector<1x1x32xf32>
    %196 = vector.shape_cast %195 : vector<1x1x32xf32> to vector<1x32xf32>
    %197 = vector.broadcast %196 : vector<1x32xf32> to vector<16x32xf32>
    %198 = arith.addf %194, %197 : vector<16x32xf32>
    %c0_112 = arith.constant 0 : index
    %c0_113 = arith.constant 0 : index
    %199 = vector.load %arg17[%c0_112, %c0_113] : memref<16x32xf32, #tpu.memory_space<vmem>>, vector<16x32xf32>
    tpu.vector_store %arg17[%c0_112, %c0_113], %198 {strides = array<i32>} : memref<16x32xf32, #tpu.memory_space<vmem>>, vector<16x32xf32>,
    %c0_114 = arith.constant 0 : index
    %c0_115 = arith.constant 0 : index
    %c0_116 = arith.constant 0 : index
    %c0_117 = arith.constant 0 : index
    %200 = vector.load %arg16[%c0_114, %c0_115, %c0_116, %c0_117] : memref<1x1x16x32xf32, #tpu.memory_space<vmem>>, vector<1x1x16x32xf32>
    %201 = vector.shape_cast %200 : vector<1x1x16x32xf32> to vector<16x32xf32>
    %202 = vector.shape_cast %198 : vector<16x32xf32> to vector<1x1x16x32xf32>
    tpu.vector_store %arg16[%c0_114, %c0_115, %c0_116, %c0_117], %202 {strides = array<i32>} : memref<1x1x16x32xf32, #tpu.memory_space<vmem>>, vector<1x1x16x32xf32>,
    return
  }
  func.func @transform_0(%arg0: i32, %arg1: i32) -> (i32, i32, i32) {
    %c0_i32 = arith.constant 0 : i32
    %c0_i32_0 = arith.constant 0 : i32
    %c0_i32_1 = arith.constant 0 : i32
    return %arg0, %c0_i32, %c0_i32_0 : i32, i32, i32
  }
  func.func @transform_1(%arg0: i32, %arg1: i32) -> (i32, i32, i32, i32) {
    %c0_i32 = arith.constant 0 : i32
    %c0_i32_0 = arith.constant 0 : i32
    %c0_i32_1 = arith.constant 0 : i32
    %c0_i32_2 = arith.constant 0 : i32
    return %arg0, %c0_i32, %c0_i32_0, %c0_i32_1 : i32, i32, i32, i32
  }
  func.func @transform_2(%arg0: i32, %arg1: i32) -> (i32, i32, i32) {
    %c0_i32 = arith.constant 0 : i32
    %c0_i32_0 = arith.constant 0 : i32
    %c0_i32_1 = arith.constant 0 : i32
    return %arg1, %c0_i32, %c0_i32_0 : i32, i32, i32
  }
  func.func @transform_3(%arg0: i32, %arg1: i32) -> (i32, i32, i32) {
    %c0_i32 = arith.constant 0 : i32
    %c0_i32_0 = arith.constant 0 : i32
    %c0_i32_1 = arith.constant 0 : i32
    return %arg1, %c0_i32, %c0_i32_0 : i32, i32, i32
  }
  func.func @transform_4(%arg0: i32, %arg1: i32) -> (i32, i32, i32) {
    %c0_i32 = arith.constant 0 : i32
    %c0_i32_0 = arith.constant 0 : i32
    %c0_i32_1 = arith.constant 0 : i32
    return %arg1, %c0_i32, %c0_i32_0 : i32, i32, i32
  }
  func.func @transform_5(%arg0: i32, %arg1: i32) -> (i32, i32, i32) {
    %c0_i32 = arith.constant 0 : i32
    %c0_i32_0 = arith.constant 0 : i32
    %c0_i32_1 = arith.constant 0 : i32
    return %arg1, %c0_i32, %c0_i32_0 : i32, i32, i32
  }
  func.func @transform_6(%arg0: i32, %arg1: i32) -> (i32, i32, i32) {
    %c0_i32 = arith.constant 0 : i32
    %c0_i32_0 = arith.constant 0 : i32
    %c0_i32_1 = arith.constant 0 : i32
    return %arg1, %c0_i32, %c0_i32_0 : i32, i32, i32
  }
  func.func @transform_7(%arg0: i32, %arg1: i32) -> (i32, i32, i32) {
    %c0_i32 = arith.constant 0 : i32
    %c0_i32_0 = arith.constant 0 : i32
    %c0_i32_1 = arith.constant 0 : i32
    return %arg1, %c0_i32, %c0_i32_0 : i32, i32, i32
  }
  func.func @transform_8(%arg0: i32, %arg1: i32) -> (i32, i32, i32) {
    %c0_i32 = arith.constant 0 : i32
    %c0_i32_0 = arith.constant 0 : i32
    %c0_i32_1 = arith.constant 0 : i32
    return %arg1, %c0_i32, %c0_i32_0 : i32, i32, i32
  }
  func.func @transform_9(%arg0: i32, %arg1: i32) -> (i32, i32, i32) {
    %c0_i32 = arith.constant 0 : i32
    %c0_i32_0 = arith.constant 0 : i32
    %c0_i32_1 = arith.constant 0 : i32
    return %arg1, %c0_i32, %c0_i32_0 : i32, i32, i32
  }
  func.func @transform_10(%arg0: i32, %arg1: i32) -> (i32, i32, i32) {
    %c0_i32 = arith.constant 0 : i32
    %c0_i32_0 = arith.constant 0 : i32
    %c0_i32_1 = arith.constant 0 : i32
    return %arg1, %c0_i32, %c0_i32_0 : i32, i32, i32
  }
  func.func @transform_11(%arg0: i32, %arg1: i32) -> (i32, i32, i32) {
    %c0_i32 = arith.constant 0 : i32
    %c0_i32_0 = arith.constant 0 : i32
    %c0_i32_1 = arith.constant 0 : i32
    return %arg1, %c0_i32, %c0_i32_0 : i32, i32, i32
  }
  func.func @transform_12(%arg0: i32, %arg1: i32) -> (i32, i32, i32) {
    %c0_i32 = arith.constant 0 : i32
    %c0_i32_0 = arith.constant 0 : i32
    %c0_i32_1 = arith.constant 0 : i32
    return %arg1, %c0_i32, %c0_i32_0 : i32, i32, i32
  }
  func.func @transform_13(%arg0: i32, %arg1: i32) -> (i32, i32, i32) {
    %c0_i32 = arith.constant 0 : i32
    %c0_i32_0 = arith.constant 0 : i32
    %c0_i32_1 = arith.constant 0 : i32
    return %arg1, %c0_i32, %c0_i32_0 : i32, i32, i32
  }
  func.func @transform_14(%arg0: i32, %arg1: i32) -> (i32, i32, i32, i32) {
    %c0_i32 = arith.constant 0 : i32
    %c0_i32_0 = arith.constant 0 : i32
    %c0_i32_1 = arith.constant 0 : i32
    return %arg0, %arg1, %c0_i32, %c0_i32_0 : i32, i32, i32, i32
  }
}

</mosaic_0001>

<llo_original>
// kernel: tpu_custom_call.1
$region0: #{tpu_custom_call.1}
  #allocation0 [shape = 'u32[]', space=smem, size = 0x4, offset = 0x4, fixed_abs, tag = 'smem constant byte address 0x4 - core index']
  #allocation1 [shape = 'u32[72,128]{1,0:T(1,128)}', space=vmem, size = 0x9000, scoped, tag = 'internal scratch']
  #allocation2 [shape = 'f32[16,32]{1,0:T(8,128)}', space=vmem, size = 0x2000, scoped, tag = 'scratch operand']
  #allocation3 [shape = 'bf16[4,16,8]{2,1,0:T(8,128)(2,1)}', space=vmem, size = 0x4000, scoped, tag = 'scratch operand']
  #allocation4 [shape = 'bf16[4,16,8]{2,1,0:T(8,128)(2,1)}', space=vmem, size = 0x4000, scoped, tag = 'scratch operand']
  #allocation5 [shape = 'bf16[4,16,8]{2,1,0:T(8,128)(2,1)}', space=vmem, size = 0x4000, scoped, tag = 'scratch operand']
  #allocation6 [shape = 'bf16[16,32]{1,0:T(8,128)(2,1)}', space=vmem, size = 0x1000, scoped, tag = 'scratch operand']
  %s0 = inlined_call_operand.hbm [shape: f32[2,16,32], index: 0, kind: input, shape index: {}]
  %s1 = inlined_call_operand.hbm [shape: bf16[2,4,16,16], index: 1, kind: input, shape index: {}]
  %s2 = inlined_call_operand.hbm [shape: bf16[2,32,96], index: 2, kind: input, shape index: {}]
  %s3 = inlined_call_operand.vmem [shape: f32[2,1,96], index: 3, kind: input, shape index: {}]
  %s4 = inlined_call_operand.hbm [shape: bf16[2,32,32], index: 4, kind: input, shape index: {}]
  %s5 = inlined_call_operand.vmem [shape: f32[2,1,32], index: 5, kind: input, shape index: {}]
  %s6 = inlined_call_operand.hbm [shape: f32[2,1,32], index: 6, kind: input, shape index: {}]
  %s7 = inlined_call_operand.vmem [shape: f32[2,1,32], index: 7, kind: input, shape index: {}]
  %s8 = inlined_call_operand.hbm [shape: bf16[2,32,32], index: 8, kind: input, shape index: {}]
  %s9 = inlined_call_operand.vmem [shape: f32[2,1,32], index: 9, kind: input, shape index: {}]
  %s10 = inlined_call_operand.hbm [shape: bf16[2,32,32], index: 10, kind: input, shape index: {}]
  %s11 = inlined_call_operand.vmem [shape: f32[2,1,32], index: 11, kind: input, shape index: {}]
  %s12 = inlined_call_operand.hbm [shape: f32[2,1,32], index: 12, kind: input, shape index: {}]
  %s13 = inlined_call_operand.vmem [shape: f32[2,1,32], index: 13, kind: input, shape index: {}]
  %s14 = inlined_call_operand.hbm [shape: f32[2,2,16,32], index: 14, kind: output, shape index: {}]
  %s15 = sld [smem:[#allocation0]]
  $region125: #{tpu_custom_call.1} parent=0
    _
  %s17 = ssub.s32 1, %s15
  %s18 = scalar_select 0, %s17, %s15
  $region1: #{tpu_custom_call.1} parent=0
    #allocation7 [shape = 'u8[16384]{0}', space=vmem, size = 0x4000, scoped, tag = 'input window, operand 0']
    #allocation8 [shape = 's32[2]{0}', space=sflag, size = 0x8, scoped, tag = 'scoped memory for tpu_custom_call.1']
    #allocation9 [shape = 's32[2]{0}', space=sflag, size = 0x8, scoped, tag = 'scoped memory for tpu_custom_call.1']
    #allocation10 [shape = 'u8[32768]{0}', space=vmem, size = 0x8000, scoped, tag = 'input window, operand 1']
    #allocation11 [shape = 's32[2]{0}', space=sflag, size = 0x8, scoped, tag = 'scoped memory for tpu_custom_call.1']
    #allocation12 [shape = 'u8[16384]{0}', space=vmem, size = 0x4000, scoped, tag = 'input window, operand 2']
    #allocation13 [shape = 'u8[16384]{0}', space=vmem, size = 0x4000, scoped, tag = 'input window, operand 4']
    #allocation14 [shape = 's32[2]{0}', space=sflag, size = 0x8, scoped, tag = 'scoped memory for tpu_custom_call.1']
    #allocation15 [shape = 'u8[1024]{0}', space=vmem, size = 0x400, scoped, tag = 'input window, operand 6']
    #allocation16 [shape = 'u8[16384]{0}', space=vmem, size = 0x4000, scoped, tag = 'input window, operand 8']
    #allocation17 [shape = 's32[2]{0}', space=sflag, size = 0x8, scoped, tag = 'scoped memory for tpu_custom_call.1']
    #allocation18 [shape = 'u8[16384]{0}', space=vmem, size = 0x4000, scoped, tag = 'input window, operand 10']
    #allocation19 [shape = 'u8[1024]{0}', space=vmem, size = 0x400, scoped, tag = 'input window, operand 12']
    #allocation20 [shape = 's32[2]{0}', space=sflag, size = 0x8, scoped, tag = 'scoped memory for tpu_custom_call.1']
    #allocation21 [shape = 'u8[16384]{0}', space=vmem, size = 0x4000, scoped, tag = 'output window, operand 0']
    %19 = vsyncpa [#allocation8], 0
    %s20 = scalar_lea.sflag [#allocation8], 1
    %21 = vsyncpa %s20, 0
    %22 = vsyncpa [#allocation11], 0
    %s23 = scalar_lea.sflag [#allocation11], 1
    %24 = vsyncpa %s23, 0
    %25 = vsyncpa [#allocation14], 0
    %s26 = scalar_lea.sflag [#allocation14], 1
    %27 = vsyncpa %s26, 0
    %28 = vsyncpa [#allocation17], 0
    %s29 = scalar_lea.sflag [#allocation17], 1
    %30 = vsyncpa %s29, 0
    %31 = vsyncpa [#allocation20], 0
    %s32 = scalar_lea.sflag [#allocation20], 1
    %33 = vsyncpa %s32, 0
    %34 = vsyncpa [#allocation9], 0
    %s35 = scalar_lea.sflag [#allocation9], 1
    %36 = vsyncpa %s35, 0
    loop: start=0, step=1, limit=6
    $region2: #{tpu_custom_call.1} parent=1 // loop_pre_header
      _
    $region3: #{tpu_custom_call.1} parent=1 // loop_header
      %s38 = sphi 0, %s42
      %p39 = scmp.ge.s32.totalorder %s38, 6
      %s45 = sphi 0, %s57
      %s46 = sphi 0, %s53
      %s47 = sphi 0, %s45
      %s48 = sphi 0, %s46
      %s49 = sphi 0, %s47
      %s50 = sphi 0, %s48
      %s60 = sphi 0, %s62
      %s63 = sphi 0, %s60
      %s64 = sphi 0, %s63
      %s80 = sphi 0, %s64
      %s86 = sphi 0, %s88
      %s89 = sphi 0, %s86
      %s90 = sphi 0, %s89
      %s106 = sphi 0, %s90
      %s112 = sphi 0, %s114
      %s115 = sphi 0, %s112
      %s116 = sphi 0, %s115
      %s132 = sphi 0, %s116
      %s138 = sphi 0, %s140
      %s141 = sphi 0, %s138
      %s142 = sphi 0, %s141
      %s158 = sphi 0, %s142
      %s164 = sphi 0, %s166
      %s167 = sphi 0, %s164
      %s168 = sphi 0, %s167
      %s184 = sphi 0, %s168
      %s190 = sphi 0, %s192
      %s193 = sphi 0, %s190
      %s194 = sphi 0, %s193
      %s210 = sphi 0, %s194
      %s216 = sphi 0, %s218
      %s219 = sphi 0, %s216
      %s220 = sphi 0, %s219
      %s236 = sphi 0, %s220
      %s242 = sphi 0, %s244
      %s245 = sphi 0, %s242
      %s246 = sphi 0, %s245
      %s262 = sphi 0, %s246
      %s268 = sphi 0, %s270
      %s271 = sphi 0, %s268
      %s272 = sphi 0, %s271
      %s288 = sphi 0, %s272
      %s294 = sphi 0, %s296
      %s297 = sphi 0, %s294
      %s298 = sphi 0, %s297
      %s314 = sphi 0, %s298
      %s320 = sphi 0, %s322
      %s323 = sphi 0, %s320
      %s324 = sphi 0, %s323
      %s340 = sphi 0, %s324
      %s346 = sphi 0, %s348
      %s349 = sphi 0, %s346
      %s350 = sphi 0, %s349
      %s366 = sphi 0, %s350
      %s372 = sphi 0, %s374
      %s375 = sphi 0, %s372
      %s376 = sphi 0, %s375
      %s392 = sphi 0, %s376
      %s398 = sphi 0, %s400
      %s401 = sphi 0, %s398
      %s402 = sphi 0, %s401
      %s418 = sphi 0, %s402
      %s426 = sphi 0, %s428
      %s429 = sphi 0, %s426
      %s430 = sphi 0, %s429
      %s446 = sphi 0, %s430
    $region4: #{tpu_custom_call.1} parent=1 // loop_header_branch
      %41 = sbr.rel (%p39) target = $region8
    $region5: #{tpu_custom_call.1} parent=1 // loop_body
      %s43 = ssub.s32 %s38, 1
      %s44 = ssub.s32 %s38, 2
      %s51 = sadd.s32 1, %s46
      %p52 = scmp.ge.s32.totalorder %s51, 2
      %s53 = scalar_select %p52, 0, %s51
      %s54 = sadd.s32 1, %s45
      %s55 = scalar_select %p52, %s54, %s45
      %p56 = scmp.ge.s32.totalorder %s55, 2
      %s57 = scalar_select %p56, 0, %s55
      %s58 = ssub.s32 %s45, %s57
      %p59 = scmp.eq.s32.totalorder %s58, 0
      %s61 = sadd.s32 %s60, 1
      %s62 = scalar_select %p59, %s60, %s61
      %p65 = pneg %p59
      %p66 = scmp.eq.s32.totalorder %s38, 3
      %p67 = por %p65, %p66
      %p68 = scmp.ne.s32.totalorder %s60, %s63
      %p69 = scmp.eq.s32.totalorder %s38, 0
      %p70 = por %p68, %p69
      %p71 = scmp.ne.s32.totalorder %s60, %s63
      %p72 = scmp.eq.s32.totalorder %s43, 3
      %p73 = por %p71, %p72
      %p74 = scmp.ne.s32.totalorder %s63, %s64
      %p75 = scmp.eq.s32.totalorder %s43, 0
      %p76 = por %p74, %p75
      %p77 = scmp.ne.s32.totalorder %s63, %s64
      %p78 = scmp.eq.s32.totalorder %s44, 3
      %p79 = por %p77, %p78
      %p81 = scmp.ne.s32.totalorder %s64, %s80
      %p82 = scmp.eq.s32.totalorder %s44, 0
      %p83 = por %p81, %p82
      %s84 = ssub.s32 %s45, %s57
      %p85 = scmp.eq.s32.totalorder %s84, 0
      %s87 = sadd.s32 %s86, 1
      %s88 = scalar_select %p85, %s86, %s87
      %p91 = pneg %p85
      %p92 = scmp.eq.s32.totalorder %s38, 3
      %p93 = por %p91, %p92
      %p94 = scmp.ne.s32.totalorder %s86, %s89
      %p95 = scmp.eq.s32.totalorder %s38, 0
      %p96 = por %p94, %p95
      %p97 = scmp.ne.s32.totalorder %s86, %s89
      %p98 = scmp.eq.s32.totalorder %s43, 3
      %p99 = por %p97, %p98
      %p100 = scmp.ne.s32.totalorder %s89, %s90
      %p101 = scmp.eq.s32.totalorder %s43, 0
      %p102 = por %p100, %p101
      %p103 = scmp.ne.s32.totalorder %s89, %s90
      %p104 = scmp.eq.s32.totalorder %s44, 3
      %p105 = por %p103, %p104
      %p107 = scmp.ne.s32.totalorder %s90, %s106
      %p108 = scmp.eq.s32.totalorder %s44, 0
      %p109 = por %p107, %p108
      %s110 = ssub.s32 %s46, %s53
      %p111 = scmp.eq.s32.totalorder %s110, 0
      %s113 = sadd.s32 %s112, 1
      %s114 = scalar_select %p111, %s112, %s113
      %p117 = pneg %p111
      %p118 = scmp.eq.s32.totalorder %s38, 3
      %p119 = por %p117, %p118
      %p120 = scmp.ne.s32.totalorder %s112, %s115
      %p121 = scmp.eq.s32.totalorder %s38, 0
      %p122 = por %p120, %p121
      %p123 = scmp.ne.s32.totalorder %s112, %s115
      %p124 = scmp.eq.s32.totalorder %s43, 3
      %p125 = por %p123, %p124
      %p126 = scmp.ne.s32.totalorder %s115, %s116
      %p127 = scmp.eq.s32.totalorder %s43, 0
      %p128 = por %p126, %p127
      %p129 = scmp.ne.s32.totalorder %s115, %s116
      %p130 = scmp.eq.s32.totalorder %s44, 3
      %p131 = por %p129, %p130
      %p133 = scmp.ne.s32.totalorder %s116, %s132
      %p134 = scmp.eq.s32.totalorder %s44, 0
      %p135 = por %p133, %p134
      %s136 = ssub.s32 %s46, %s53
      %p137 = scmp.eq.s32.totalorder %s136, 0
      %s139 = sadd.s32 %s138, 1
      %s140 = scalar_select %p137, %s138, %s139
      %p143 = pneg %p137
      %p144 = scmp.eq.s32.totalorder %s38, 3
      %p145 = por %p143, %p144
      %p146 = scmp.ne.s32.totalorder %s138, %s141
      %p147 = scmp.eq.s32.totalorder %s38, 0
      %p148 = por %p146, %p147
      %p149 = scmp.ne.s32.totalorder %s138, %s141
      %p150 = scmp.eq.s32.totalorder %s43, 3
      %p151 = por %p149, %p150
      %p152 = scmp.ne.s32.totalorder %s141, %s142
      %p153 = scmp.eq.s32.totalorder %s43, 0
      %p154 = por %p152, %p153
      %p155 = scmp.ne.s32.totalorder %s141, %s142
      %p156 = scmp.eq.s32.totalorder %s44, 3
      %p157 = por %p155, %p156
      %p159 = scmp.ne.s32.totalorder %s142, %s158
      %p160 = scmp.eq.s32.totalorder %s44, 0
      %p161 = por %p159, %p160
      %s162 = ssub.s32 %s46, %s53
      %p163 = scmp.eq.s32.totalorder %s162, 0
      %s165 = sadd.s32 %s164, 1
      %s166 = scalar_select %p163, %s164, %s165
      %p169 = pneg %p163
      %p170 = scmp.eq.s32.totalorder %s38, 3
      %p171 = por %p169, %p170
      %p172 = scmp.ne.s32.totalorder %s164, %s167
      %p173 = scmp.eq.s32.totalorder %s38, 0
      %p174 = por %p172, %p173
      %p175 = scmp.ne.s32.totalorder %s164, %s167
      %p176 = scmp.eq.s32.totalorder %s43, 3
      %p177 = por %p175, %p176
      %p178 = scmp.ne.s32.totalorder %s167, %s168
      %p179 = scmp.eq.s32.totalorder %s43, 0
      %p180 = por %p178, %p179
      %p181 = scmp.ne.s32.totalorder %s167, %s168
      %p182 = scmp.eq.s32.totalorder %s44, 3
      %p183 = por %p181, %p182
      %p185 = scmp.ne.s32.totalorder %s168, %s184
      %p186 = scmp.eq.s32.totalorder %s44, 0
      %p187 = por %p185, %p186
      %s188 = ssub.s32 %s46, %s53
      %p189 = scmp.eq.s32.totalorder %s188, 0
      %s191 = sadd.s32 %s190, 1
      %s192 = scalar_select %p189, %s190, %s191
      %p195 = pneg %p189
      %p196 = scmp.eq.s32.totalorder %s38, 3
      %p197 = por %p195, %p196
      %p198 = scmp.ne.s32.totalorder %s190, %s193
      %p199 = scmp.eq.s32.totalorder %s38, 0
      %p200 = por %p198, %p199
      %p201 = scmp.ne.s32.totalorder %s190, %s193
      %p202 = scmp.eq.s32.totalorder %s43, 3
      %p203 = por %p201, %p202
      %p204 = scmp.ne.s32.totalorder %s193, %s194
      %p205 = scmp.eq.s32.totalorder %s43, 0
      %p206 = por %p204, %p205
      %p207 = scmp.ne.s32.totalorder %s193, %s194
      %p208 = scmp.eq.s32.totalorder %s44, 3
      %p209 = por %p207, %p208
      %p211 = scmp.ne.s32.totalorder %s194, %s210
      %p212 = scmp.eq.s32.totalorder %s44, 0
      %p213 = por %p211, %p212
      %s214 = ssub.s32 %s46, %s53
      %p215 = scmp.eq.s32.totalorder %s214, 0
      %s217 = sadd.s32 %s216, 1
      %s218 = scalar_select %p215, %s216, %s217
      %p221 = pneg %p215
      %p222 = scmp.eq.s32.totalorder %s38, 3
      %p223 = por %p221, %p222
      %p224 = scmp.ne.s32.totalorder %s216, %s219
      %p225 = scmp.eq.s32.totalorder %s38, 0
      %p226 = por %p224, %p225
      %p227 = scmp.ne.s32.totalorder %s216, %s219
      %p228 = scmp.eq.s32.totalorder %s43, 3
      %p229 = por %p227, %p228
      %p230 = scmp.ne.s32.totalorder %s219, %s220
      %p231 = scmp.eq.s32.totalorder %s43, 0
      %p232 = por %p230, %p231
      %p233 = scmp.ne.s32.totalorder %s219, %s220
      %p234 = scmp.eq.s32.totalorder %s44, 3
      %p235 = por %p233, %p234
      %p237 = scmp.ne.s32.totalorder %s220, %s236
      %p238 = scmp.eq.s32.totalorder %s44, 0
      %p239 = por %p237, %p238
      %s240 = ssub.s32 %s46, %s53
      %p241 = scmp.eq.s32.totalorder %s240, 0
      %s243 = sadd.s32 %s242, 1
      %s244 = scalar_select %p241, %s242, %s243
      %p247 = pneg %p241
      %p248 = scmp.eq.s32.totalorder %s38, 3
      %p249 = por %p247, %p248
      %p250 = scmp.ne.s32.totalorder %s242, %s245
      %p251 = scmp.eq.s32.totalorder %s38, 0
      %p252 = por %p250, %p251
      %p253 = scmp.ne.s32.totalorder %s242, %s245
      %p254 = scmp.eq.s32.totalorder %s43, 3
      %p255 = por %p253, %p254
      %p256 = scmp.ne.s32.totalorder %s245, %s246
      %p257 = scmp.eq.s32.totalorder %s43, 0
      %p258 = por %p256, %p257
      %p259 = scmp.ne.s32.totalorder %s245, %s246
      %p260 = scmp.eq.s32.totalorder %s44, 3
      %p261 = por %p259, %p260
      %p263 = scmp.ne.s32.totalorder %s246, %s262
      %p264 = scmp.eq.s32.totalorder %s44, 0
      %p265 = por %p263, %p264
      %s266 = ssub.s32 %s46, %s53
      %p267 = scmp.eq.s32.totalorder %s266, 0
      %s269 = sadd.s32 %s268, 1
      %s270 = scalar_select %p267, %s268, %s269
      %p273 = pneg %p267
      %p274 = scmp.eq.s32.totalorder %s38, 3
      %p275 = por %p273, %p274
      %p276 = scmp.ne.s32.totalorder %s268, %s271
      %p277 = scmp.eq.s32.totalorder %s38, 0
      %p278 = por %p276, %p277
      %p279 = scmp.ne.s32.totalorder %s268, %s271
      %p280 = scmp.eq.s32.totalorder %s43, 3
      %p281 = por %p279, %p280
      %p282 = scmp.ne.s32.totalorder %s271, %s272
      %p283 = scmp.eq.s32.totalorder %s43, 0
      %p284 = por %p282, %p283
      %p285 = scmp.ne.s32.totalorder %s271, %s272
      %p286 = scmp.eq.s32.totalorder %s44, 3
      %p287 = por %p285, %p286
      %p289 = scmp.ne.s32.totalorder %s272, %s288
      %p290 = scmp.eq.s32.totalorder %s44, 0
      %p291 = por %p289, %p290
      %s292 = ssub.s32 %s46, %s53
      %p293 = scmp.eq.s32.totalorder %s292, 0
      %s295 = sadd.s32 %s294, 1
      %s296 = scalar_select %p293, %s294, %s295
      %p299 = pneg %p293
      %p300 = scmp.eq.s32.totalorder %s38, 3
      %p301 = por %p299, %p300
      %p302 = scmp.ne.s32.totalorder %s294, %s297
      %p303 = scmp.eq.s32.totalorder %s38, 0
      %p304 = por %p302, %p303
      %p305 = scmp.ne.s32.totalorder %s294, %s297
      %p306 = scmp.eq.s32.totalorder %s43, 3
      %p307 = por %p305, %p306
      %p308 = scmp.ne.s32.totalorder %s297, %s298
      %p309 = scmp.eq.s32.totalorder %s43, 0
      %p310 = por %p308, %p309
      %p311 = scmp.ne.s32.totalorder %s297, %s298
      %p312 = scmp.eq.s32.totalorder %s44, 3
      %p313 = por %p311, %p312
      %p315 = scmp.ne.s32.totalorder %s298, %s314
      %p316 = scmp.eq.s32.totalorder %s44, 0
      %p317 = por %p315, %p316
      %s318 = ssub.s32 %s46, %s53
      %p319 = scmp.eq.s32.totalorder %s318, 0
      %s321 = sadd.s32 %s320, 1
      %s322 = scalar_select %p319, %s320, %s321
      %p325 = pneg %p319
      %p326 = scmp.eq.s32.totalorder %s38, 3
      %p327 = por %p325, %p326
      %p328 = scmp.ne.s32.totalorder %s320, %s323
      %p329 = scmp.eq.s32.totalorder %s38, 0
      %p330 = por %p328, %p329
      %p331 = scmp.ne.s32.totalorder %s320, %s323
      %p332 = scmp.eq.s32.totalorder %s43, 3
      %p333 = por %p331, %p332
      %p334 = scmp.ne.s32.totalorder %s323, %s324
      %p335 = scmp.eq.s32.totalorder %s43, 0
      %p336 = por %p334, %p335
      %p337 = scmp.ne.s32.totalorder %s323, %s324
      %p338 = scmp.eq.s32.totalorder %s44, 3
      %p339 = por %p337, %p338
      %p341 = scmp.ne.s32.totalorder %s324, %s340
      %p342 = scmp.eq.s32.totalorder %s44, 0
      %p343 = por %p341, %p342
      %s344 = ssub.s32 %s46, %s53
      %p345 = scmp.eq.s32.totalorder %s344, 0
      %s347 = sadd.s32 %s346, 1
      %s348 = scalar_select %p345, %s346, %s347
      %p351 = pneg %p345
      %p352 = scmp.eq.s32.totalorder %s38, 3
      %p353 = por %p351, %p352
      %p354 = scmp.ne.s32.totalorder %s346, %s349
      %p355 = scmp.eq.s32.totalorder %s38, 0
      %p356 = por %p354, %p355
      %p357 = scmp.ne.s32.totalorder %s346, %s349
      %p358 = scmp.eq.s32.totalorder %s43, 3
      %p359 = por %p357, %p358
      %p360 = scmp.ne.s32.totalorder %s349, %s350
      %p361 = scmp.eq.s32.totalorder %s43, 0
      %p362 = por %p360, %p361
      %p363 = scmp.ne.s32.totalorder %s349, %s350
      %p364 = scmp.eq.s32.totalorder %s44, 3
      %p365 = por %p363, %p364
      %p367 = scmp.ne.s32.totalorder %s350, %s366
      %p368 = scmp.eq.s32.totalorder %s44, 0
      %p369 = por %p367, %p368
      %s370 = ssub.s32 %s46, %s53
      %p371 = scmp.eq.s32.totalorder %s370, 0
      %s373 = sadd.s32 %s372, 1
      %s374 = scalar_select %p371, %s372, %s373
      %p377 = pneg %p371
      %p378 = scmp.eq.s32.totalorder %s38, 3
      %p379 = por %p377, %p378
      %p380 = scmp.ne.s32.totalorder %s372, %s375
      %p381 = scmp.eq.s32.totalorder %s38, 0
      %p382 = por %p380, %p381
      %p383 = scmp.ne.s32.totalorder %s372, %s375
      %p384 = scmp.eq.s32.totalorder %s43, 3
      %p385 = por %p383, %p384
      %p386 = scmp.ne.s32.totalorder %s375, %s376
      %p387 = scmp.eq.s32.totalorder %s43, 0
      %p388 = por %p386, %p387
      %p389 = scmp.ne.s32.totalorder %s375, %s376
      %p390 = scmp.eq.s32.totalorder %s44, 3
      %p391 = por %p389, %p390
      %p393 = scmp.ne.s32.totalorder %s376, %s392
      %p394 = scmp.eq.s32.totalorder %s44, 0
      %p395 = por %p393, %p394
      %s396 = ssub.s32 %s46, %s53
      %p397 = scmp.eq.s32.totalorder %s396, 0
      %s399 = sadd.s32 %s398, 1
      %s400 = scalar_select %p397, %s398, %s399
      %p403 = pneg %p397
      %p404 = scmp.eq.s32.totalorder %s38, 3
      %p405 = por %p403, %p404
      %p406 = scmp.ne.s32.totalorder %s398, %s401
      %p407 = scmp.eq.s32.totalorder %s38, 0
      %p408 = por %p406, %p407
      %p409 = scmp.ne.s32.totalorder %s398, %s401
      %p410 = scmp.eq.s32.totalorder %s43, 3
      %p411 = por %p409, %p410
      %p412 = scmp.ne.s32.totalorder %s401, %s402
      %p413 = scmp.eq.s32.totalorder %s43, 0
      %p414 = por %p412, %p413
      %p415 = scmp.ne.s32.totalorder %s401, %s402
      %p416 = scmp.eq.s32.totalorder %s44, 3
      %p417 = por %p415, %p416
      %p419 = scmp.ne.s32.totalorder %s402, %s418
      %p420 = scmp.eq.s32.totalorder %s44, 0
      %p421 = por %p419, %p420
      %s422 = ssub.s32 %s45, %s57
      %s423 = ssub.s32 %s46, %s53
      %s424 = sor.u32 %s422, %s423
      %p425 = scmp.eq.s32.totalorder %s424, 0
      %s427 = sadd.s32 %s426, 1
      %s428 = scalar_select %p425, %s426, %s427
      %p431 = pneg %p425
      %p432 = scmp.eq.s32.totalorder %s38, 3
      %p433 = por %p431, %p432
      %p434 = scmp.ne.s32.totalorder %s426, %s429
      %p435 = scmp.eq.s32.totalorder %s38, 0
      %p436 = por %p434, %p435
      %p437 = scmp.ne.s32.totalorder %s426, %s429
      %p438 = scmp.eq.s32.totalorder %s43, 3
      %p439 = por %p437, %p438
      %p440 = scmp.ne.s32.totalorder %s429, %s430
      %p441 = scmp.eq.s32.totalorder %s43, 0
      %p442 = por %p440, %p441
      %p443 = scmp.ne.s32.totalorder %s429, %s430
      %p444 = scmp.eq.s32.totalorder %s44, 3
      %p445 = por %p443, %p444
      %p447 = scmp.ne.s32.totalorder %s430, %s446
      %p448 = scmp.eq.s32.totalorder %s44, 0
      %p449 = por %p447, %p448
      %p450 = scmp.le.s32.totalorder 1, %s38
      %p451 = scmp.lt.s32.totalorder %s38, 5
      %p452 = pnand %p450, %p451
      %p453 = pneg %p452
      // Predicated region
      $region9: #{tpu_custom_call.1} parent=5 // pred_check
        _
      $region10: #{tpu_custom_call.1} parent=5 // pred_check_branch
        %455 = sbr.rel (%p452) target = $region12
      $region11: #{tpu_custom_call.1} parent=5 // pred_region
        %s456 = ssub.s32 %s38, 1
      $region12: #{tpu_custom_call.1} parent=5 // pred_fallthru
        _
      %p457 = scmp.lt.s32.totalorder %s38, 4
      // Predicated region
      $region13: #{tpu_custom_call.1} parent=5 // pred_check
        %p458 = pneg %p457
      $region14: #{tpu_custom_call.1} parent=5 // pred_check_branch
        %460 = sbr.rel (%p458) target = $region16
      $region15: #{tpu_custom_call.1} parent=5 // pred_region
        // Predicated region
        $region17: #{tpu_custom_call.1} parent=15 // pred_check
          %p461 = pneg %p70
        $region18: #{tpu_custom_call.1} parent=15 // pred_check_branch
          %463 = sbr.rel (%p461) target = $region20
        $region19: #{tpu_custom_call.1} parent=15 // pred_region
          %s464 = sand.u32 %s60, 1
          %s465 = scalar_lea.sflag [#allocation8], %s464
          %s466 = sand.u32 %s60, 1
          %s467 = smul.addr %s466, 16
          %s468 = scalar_lea.vmem [#allocation7], %s467
          %470 = vsyncadd %s465, 0
          %s471 = smul.addr %s45, 2
          %s472 = smul.addr %s471, 8
          %s473 = scalar_lea.hbm %s0, %s472
          %s474 = sshll.u32 %s473, 4
          %s475 = int_to_ptr.hbm [resolvable:$true] %s474
          %s476 = sshll.u32 %s468, 4
          %s477 = int_to_ptr.vmem [resolvable:$true] %s476
          %482 = dma.hbm_to_vmem [thread:$0]  %s475, 256, %s477, %s465, 128, 128, 8
        $region20: #{tpu_custom_call.1} parent=15 // pred_fallthru
          _
        // Predicated region
        $region21: #{tpu_custom_call.1} parent=15 // pred_check
          %p483 = pneg %p96
        $region22: #{tpu_custom_call.1} parent=15 // pred_check_branch
          %485 = sbr.rel (%p483) target = $region24
        $region23: #{tpu_custom_call.1} parent=15 // pred_region
          %s486 = sand.u32 %s38, 1
          %s487 = scalar_lea.sflag [#allocation11], %s486
          %s488 = sand.u32 %s86, 1
          %s489 = smul.addr %s488, 32
          %s490 = scalar_lea.vmem [#allocation10], %s489
          %492 = vsyncadd %s487, 0
          %s493 = smul.addr %s45, 8
          %s494 = smul.addr %s493, 4
          %s495 = scalar_lea.hbm %s1, %s494
          %s496 = sshll.u32 %s495, 4
          %s497 = int_to_ptr.hbm [resolvable:$true] %s496
          %s498 = sshll.u32 %s490, 4
          %s499 = int_to_ptr.vmem [resolvable:$true] %s498
          %504 = dma.hbm_to_vmem [thread:$0]  %s497, 512, %s499, %s487, 64, 64, 4
        $region24: #{tpu_custom_call.1} parent=15 // pred_fallthru
          _
        // Predicated region
        $region25: #{tpu_custom_call.1} parent=15 // pred_check
          %p505 = pneg %p122
        $region26: #{tpu_custom_call.1} parent=15 // pred_check_branch
          %507 = sbr.rel (%p505) target = $region28
        $region27: #{tpu_custom_call.1} parent=15 // pred_region
          %s508 = sand.u32 %s38, 1
          %s509 = scalar_lea.sflag [#allocation11], %s508
          %s510 = sand.u32 %s112, 1
          %s511 = smul.addr %s510, 16
          %s512 = scalar_lea.vmem [#allocation12], %s511
          %514 = vsyncadd %s509, 0
          %s515 = smul.addr %s46, 4
          %s516 = smul.addr %s515, 4
          %s517 = scalar_lea.hbm %s2, %s516
          %s518 = sshll.u32 %s517, 4
          %s519 = int_to_ptr.hbm [resolvable:$true] %s518
          %s520 = sshll.u32 %s512, 4
          %s521 = int_to_ptr.vmem [resolvable:$true] %s520
          %526 = dma.hbm_to_vmem [thread:$0]  %s519, 256, %s521, %s509, 64, 64, 4
        $region28: #{tpu_custom_call.1} parent=15 // pred_fallthru
          _
        // Predicated region
        $region29: #{tpu_custom_call.1} parent=15 // pred_check
          %p527 = pneg %p148
        $region30: #{tpu_custom_call.1} parent=15 // pred_check_branch
          %529 = sbr.rel (%p527) target = $region32
        $region31: #{tpu_custom_call.1} parent=15 // pred_region
          %p530 = scmp.lt.s32.totalorder %s46, 1
          %s531 = scalar_select %p530, %s46, 1
          %s532 = scalar_lea.vmem %s3, %s531
        $region32: #{tpu_custom_call.1} parent=15 // pred_fallthru
          _
        // Predicated region
        $region33: #{tpu_custom_call.1} parent=15 // pred_check
          %p533 = pneg %p174
        $region34: #{tpu_custom_call.1} parent=15 // pred_check_branch
          %535 = sbr.rel (%p533) target = $region36
        $region35: #{tpu_custom_call.1} parent=15 // pred_region
          %s536 = sand.u32 %s38, 1
          %s537 = scalar_lea.sflag [#allocation14], %s536
          %s538 = sand.u32 %s164, 1
          %s539 = smul.addr %s538, 16
          %s540 = scalar_lea.vmem [#allocation13], %s539
          %542 = vsyncadd %s537, 0
          %s543 = smul.addr %s46, 4
          %s544 = smul.addr %s543, 4
          %s545 = scalar_lea.hbm %s4, %s544
          %s546 = sshll.u32 %s545, 4
          %s547 = int_to_ptr.hbm [resolvable:$true] %s546
          %s548 = sshll.u32 %s540, 4
          %s549 = int_to_ptr.vmem [resolvable:$true] %s548
          %554 = dma.hbm_to_vmem [thread:$0]  %s547, 256, %s549, %s537, 64, 64, 4
        $region36: #{tpu_custom_call.1} parent=15 // pred_fallthru
          _
        // Predicated region
        $region37: #{tpu_custom_call.1} parent=15 // pred_check
          %p555 = pneg %p200
        $region38: #{tpu_custom_call.1} parent=15 // pred_check_branch
          %557 = sbr.rel (%p555) target = $region40
        $region39: #{tpu_custom_call.1} parent=15 // pred_region
          %p558 = scmp.lt.s32.totalorder %s46, 1
          %s559 = scalar_select %p558, %s46, 1
          %s560 = scalar_lea.vmem %s5, %s559
        $region40: #{tpu_custom_call.1} parent=15 // pred_fallthru
          _
        // Predicated region
        $region41: #{tpu_custom_call.1} parent=15 // pred_check
          %p561 = pneg %p226
        $region42: #{tpu_custom_call.1} parent=15 // pred_check_branch
          %563 = sbr.rel (%p561) target = $region44
        $region43: #{tpu_custom_call.1} parent=15 // pred_region
          %s564 = sand.u32 %s38, 1
          %s565 = scalar_lea.sflag [#allocation14], %s564
          %s566 = sand.u32 %s216, 1
          %s567 = scalar_lea.vmem [#allocation15], %s566
          %569 = vsyncadd %s565, 0
          %s570 = scalar_lea.hbm %s6, %s46
          %s572 = sshll.u32 %s570, 4
          %s573 = int_to_ptr.hbm [resolvable:$true] %s572
          %s574 = sshll.u32 %s567, 4
          %s575 = int_to_ptr.vmem [resolvable:$true] %s574
          %577 = dma.hbm_to_vmem [thread:$0]  %s573, 16, %s575, %s565
        $region44: #{tpu_custom_call.1} parent=15 // pred_fallthru
          _
        // Predicated region
        $region45: #{tpu_custom_call.1} parent=15 // pred_check
          %p578 = pneg %p252
        $region46: #{tpu_custom_call.1} parent=15 // pred_check_branch
          %580 = sbr.rel (%p578) target = $region48
        $region47: #{tpu_custom_call.1} parent=15 // pred_region
          %p581 = scmp.lt.s32.totalorder %s46, 1
          %s582 = scalar_select %p581, %s46, 1
          %s583 = scalar_lea.vmem %s7, %s582
        $region48: #{tpu_custom_call.1} parent=15 // pred_fallthru
          _
        // Predicated region
        $region49: #{tpu_custom_call.1} parent=15 // pred_check
          %p584 = pneg %p278
        $region50: #{tpu_custom_call.1} parent=15 // pred_check_branch
          %586 = sbr.rel (%p584) target = $region52
        $region51: #{tpu_custom_call.1} parent=15 // pred_region
          %s587 = sand.u32 %s38, 1
          %s588 = scalar_lea.sflag [#allocation17], %s587
          %s589 = sand.u32 %s268, 1
          %s590 = smul.addr %s589, 16
          %s591 = scalar_lea.vmem [#allocation16], %s590
          %593 = vsyncadd %s588, 0
          %s594 = smul.addr %s46, 4
          %s595 = smul.addr %s594, 4
          %s596 = scalar_lea.hbm %s8, %s595
          %s597 = sshll.u32 %s596, 4
          %s598 = int_to_ptr.hbm [resolvable:$true] %s597
          %s599 = sshll.u32 %s591, 4
          %s600 = int_to_ptr.vmem [resolvable:$true] %s599
          %605 = dma.hbm_to_vmem [thread:$0]  %s598, 256, %s600, %s588, 64, 64, 4
        $region52: #{tpu_custom_call.1} parent=15 // pred_fallthru
          _
        // Predicated region
        $region53: #{tpu_custom_call.1} parent=15 // pred_check
          %p606 = pneg %p304
        $region54: #{tpu_custom_call.1} parent=15 // pred_check_branch
          %608 = sbr.rel (%p606) target = $region56
        $region55: #{tpu_custom_call.1} parent=15 // pred_region
          %p609 = scmp.lt.s32.totalorder %s46, 1
          %s610 = scalar_select %p609, %s46, 1
          %s611 = scalar_lea.vmem %s9, %s610
        $region56: #{tpu_custom_call.1} parent=15 // pred_fallthru
          _
        // Predicated region
        $region57: #{tpu_custom_call.1} parent=15 // pred_check
          %p612 = pneg %p330
        $region58: #{tpu_custom_call.1} parent=15 // pred_check_branch
          %614 = sbr.rel (%p612) target = $region60
        $region59: #{tpu_custom_call.1} parent=15 // pred_region
          %s615 = sand.u32 %s38, 1
          %s616 = scalar_lea.sflag [#allocation17], %s615
          %s617 = sand.u32 %s320, 1
          %s618 = smul.addr %s617, 16
          %s619 = scalar_lea.vmem [#allocation18], %s618
          %621 = vsyncadd %s616, 0
          %s622 = smul.addr %s46, 4
          %s623 = smul.addr %s622, 4
          %s624 = scalar_lea.hbm %s10, %s623
          %s625 = sshll.u32 %s624, 4
          %s626 = int_to_ptr.hbm [resolvable:$true] %s625
          %s627 = sshll.u32 %s619, 4
          %s628 = int_to_ptr.vmem [resolvable:$true] %s627
          %633 = dma.hbm_to_vmem [thread:$0]  %s626, 256, %s628, %s616, 64, 64, 4
        $region60: #{tpu_custom_call.1} parent=15 // pred_fallthru
          _
        // Predicated region
        $region61: #{tpu_custom_call.1} parent=15 // pred_check
          %p634 = pneg %p356
        $region62: #{tpu_custom_call.1} parent=15 // pred_check_branch
          %636 = sbr.rel (%p634) target = $region64
        $region63: #{tpu_custom_call.1} parent=15 // pred_region
          %p637 = scmp.lt.s32.totalorder %s46, 1
          %s638 = scalar_select %p637, %s46, 1
          %s639 = scalar_lea.vmem %s11, %s638
        $region64: #{tpu_custom_call.1} parent=15 // pred_fallthru
          _
        // Predicated region
        $region65: #{tpu_custom_call.1} parent=15 // pred_check
          %p640 = pneg %p382
        $region66: #{tpu_custom_call.1} parent=15 // pred_check_branch
          %642 = sbr.rel (%p640) target = $region68
        $region67: #{tpu_custom_call.1} parent=15 // pred_region
          %s643 = sand.u32 %s372, 1
          %s644 = scalar_lea.sflag [#allocation20], %s643
          %s645 = sand.u32 %s372, 1
          %s646 = scalar_lea.vmem [#allocation19], %s645
          %648 = vsyncadd %s644, 0
          %s649 = scalar_lea.hbm %s12, %s46
          %s651 = sshll.u32 %s649, 4
          %s652 = int_to_ptr.hbm [resolvable:$true] %s651
          %s653 = sshll.u32 %s646, 4
          %s654 = int_to_ptr.vmem [resolvable:$true] %s653
          %656 = dma.hbm_to_vmem [thread:$0]  %s652, 16, %s654, %s644
        $region68: #{tpu_custom_call.1} parent=15 // pred_fallthru
          _
        // Predicated region
        $region69: #{tpu_custom_call.1} parent=15 // pred_check
          %p657 = pneg %p408
        $region70: #{tpu_custom_call.1} parent=15 // pred_check_branch
          %659 = sbr.rel (%p657) target = $region72
        $region71: #{tpu_custom_call.1} parent=15 // pred_region
          %p660 = scmp.lt.s32.totalorder %s46, 1
          %s661 = scalar_select %p660, %s46, 1
          %s662 = scalar_lea.vmem %s13, %s661
        $region72: #{tpu_custom_call.1} parent=15 // pred_fallthru
          _
      $region16: #{tpu_custom_call.1} parent=5 // pred_fallthru
        _
      %p663 = scmp.le.s32.totalorder 1, %s38
      %p664 = scmp.lt.s32.totalorder %s38, 5
      %p665 = pnand %p663, %p664
      %p666 = pneg %p665
      // Predicated region
      $region73: #{tpu_custom_call.1} parent=5 // pred_check
        _
      $region74: #{tpu_custom_call.1} parent=5 // pred_check_branch
        %668 = sbr.rel (%p665) target = $region76
      $region75: #{tpu_custom_call.1} parent=5 // pred_region
        %s669 = ssub.s32 %s38, 1
        %s670 = sand.u32 %s63, 1
        %s671 = scalar_lea.sflag [#allocation8], %s670
        %s672 = sand.u32 %s63, 1
        %s673 = smul.addr %s672, 16
        %s674 = scalar_lea.vmem [#allocation7], %s673
        // Predicated region
        $region77: #{tpu_custom_call.1} parent=75 // pred_check
          %p675 = pneg %p76
        $region78: #{tpu_custom_call.1} parent=75 // pred_check_branch
          %677 = sbr.rel (%p675) target = $region80
        $region79: #{tpu_custom_call.1} parent=75 // pred_region
          %679 = dma.done %s671, 256
        $region80: #{tpu_custom_call.1} parent=75 // pred_fallthru
          _
        %s680 = sand.u32 %s43, 1
        %s681 = scalar_lea.sflag [#allocation11], %s680
        %s682 = sand.u32 %s89, 1
        %s683 = smul.addr %s682, 32
        %s684 = scalar_lea.vmem [#allocation10], %s683
        // Predicated region
        $region81: #{tpu_custom_call.1} parent=75 // pred_check
          %p685 = pneg %p102
        $region82: #{tpu_custom_call.1} parent=75 // pred_check_branch
          %687 = sbr.rel (%p685) target = $region84
        $region83: #{tpu_custom_call.1} parent=75 // pred_region
          %689 = dma.done %s681, 512
        $region84: #{tpu_custom_call.1} parent=75 // pred_fallthru
          _
        %s690 = sand.u32 %s43, 1
        %s691 = scalar_lea.sflag [#allocation11], %s690
        %s692 = sand.u32 %s115, 1
        %s693 = smul.addr %s692, 16
        %s694 = scalar_lea.vmem [#allocation12], %s693
        // Predicated region
        $region85: #{tpu_custom_call.1} parent=75 // pred_check
          %p695 = pneg %p128
        $region86: #{tpu_custom_call.1} parent=75 // pred_check_branch
          %697 = sbr.rel (%p695) target = $region88
        $region87: #{tpu_custom_call.1} parent=75 // pred_region
          %699 = dma.done %s691, 256
        $region88: #{tpu_custom_call.1} parent=75 // pred_fallthru
          _
        %s700 = sand.u32 %s43, 1
        %s701 = scalar_lea.sflag [#allocation14], %s700
        %s702 = sand.u32 %s167, 1
        %s703 = smul.addr %s702, 16
        %s704 = scalar_lea.vmem [#allocation13], %s703
        // Predicated region
        $region89: #{tpu_custom_call.1} parent=75 // pred_check
          %p705 = pneg %p180
        $region90: #{tpu_custom_call.1} parent=75 // pred_check_branch
          %707 = sbr.rel (%p705) target = $region92
        $region91: #{tpu_custom_call.1} parent=75 // pred_region
          %709 = dma.done %s701, 256
        $region92: #{tpu_custom_call.1} parent=75 // pred_fallthru
          _
        %s710 = sand.u32 %s43, 1
        %s711 = scalar_lea.sflag [#allocation14], %s710
        %s712 = sand.u32 %s219, 1
        %s713 = scalar_lea.vmem [#allocation15], %s712
        // Predicated region
        $region93: #{tpu_custom_call.1} parent=75 // pred_check
          %p714 = pneg %p232
        $region94: #{tpu_custom_call.1} parent=75 // pred_check_branch
          %716 = sbr.rel (%p714) target = $region96
        $region95: #{tpu_custom_call.1} parent=75 // pred_region
          %718 = dma.done %s711, 16
        $region96: #{tpu_custom_call.1} parent=75 // pred_fallthru
          _
        %s719 = sand.u32 %s43, 1
        %s720 = scalar_lea.sflag [#allocation17], %s719
        %s721 = sand.u32 %s271, 1
        %s722 = smul.addr %s721, 16
        %s723 = scalar_lea.vmem [#allocation16], %s722
        // Predicated region
        $region97: #{tpu_custom_call.1} parent=75 // pred_check
          %p724 = pneg %p284
        $region98: #{tpu_custom_call.1} parent=75 // pred_check_branch
          %726 = sbr.rel (%p724) target = $region100
        $region99: #{tpu_custom_call.1} parent=75 // pred_region
          %728 = dma.done %s720, 256
        $region100: #{tpu_custom_call.1} parent=75 // pred_fallthru
          _
        %s729 = sand.u32 %s43, 1
        %s730 = scalar_lea.sflag [#allocation17], %s729
        %s731 = sand.u32 %s323, 1
        %s732 = smul.addr %s731, 16
        %s733 = scalar_lea.vmem [#allocation18], %s732
        // Predicated region
        $region101: #{tpu_custom_call.1} parent=75 // pred_check
          %p734 = pneg %p336
        $region102: #{tpu_custom_call.1} parent=75 // pred_check_branch
          %736 = sbr.rel (%p734) target = $region104
        $region103: #{tpu_custom_call.1} parent=75 // pred_region
          %738 = dma.done %s730, 256
        $region104: #{tpu_custom_call.1} parent=75 // pred_fallthru
          _
        %s739 = sand.u32 %s375, 1
        %s740 = scalar_lea.sflag [#allocation20], %s739
        %s741 = sand.u32 %s375, 1
        %s742 = scalar_lea.vmem [#allocation19], %s741
        // Predicated region
        $region105: #{tpu_custom_call.1} parent=75 // pred_check
          %p743 = pneg %p388
        $region106: #{tpu_custom_call.1} parent=75 // pred_check_branch
          %745 = sbr.rel (%p743) target = $region108
        $region107: #{tpu_custom_call.1} parent=75 // pred_region
          %747 = dma.done %s740, 16
        $region108: #{tpu_custom_call.1} parent=75 // pred_fallthru
          _
        %s748 = sand.u32 %s63, 1
        %s749 = scalar_lea.sflag [#allocation8], %s748
        %s750 = sand.u32 %s63, 1
        %s751 = smul.addr %s750, 16
        %s752 = scalar_lea.vmem [#allocation7], %s751
        %p753 = pneg %p76
        %p754 = pneg %p73
        %s755 = sand.u32 %s43, 1
        %s756 = scalar_lea.sflag [#allocation11], %s755
        %s757 = sand.u32 %s89, 1
        %s758 = smul.addr %s757, 32
        %s759 = scalar_lea.vmem [#allocation10], %s758
        %p760 = pneg %p102
        %p761 = pneg %p99
        %s762 = sand.u32 %s43, 1
        %s763 = scalar_lea.sflag [#allocation11], %s762
        %s764 = sand.u32 %s115, 1
        %s765 = smul.addr %s764, 16
        %s766 = scalar_lea.vmem [#allocation12], %s765
        %p767 = pneg %p128
        %p768 = pneg %p125
        %p769 = scmp.lt.s32.totalorder %s48, 1
        %s770 = scalar_select %p769, %s48, 1
        %s771 = scalar_lea.vmem %s3, %s770
        %p772 = pneg %p154
        %p773 = pneg %p151
        %s774 = sand.u32 %s43, 1
        %s775 = scalar_lea.sflag [#allocation14], %s774
        %s776 = sand.u32 %s167, 1
        %s777 = smul.addr %s776, 16
        %s778 = scalar_lea.vmem [#allocation13], %s777
        %p779 = pneg %p180
        %p780 = pneg %p177
        %p781 = scmp.lt.s32.totalorder %s48, 1
        %s782 = scalar_select %p781, %s48, 1
        %s783 = scalar_lea.vmem %s5, %s782
        %p784 = pneg %p206
        %p785 = pneg %p203
        %s786 = sand.u32 %s43, 1
        %s787 = scalar_lea.sflag [#allocation14], %s786
        %s788 = sand.u32 %s219, 1
        %s789 = scalar_lea.vmem [#allocation15], %s788
        %p790 = pneg %p232
        %p791 = pneg %p229
        %p792 = scmp.lt.s32.totalorder %s48, 1
        %s793 = scalar_select %p792, %s48, 1
        %s794 = scalar_lea.vmem %s7, %s793
        %p795 = pneg %p258
        %p796 = pneg %p255
        %s797 = sand.u32 %s43, 1
        %s798 = scalar_lea.sflag [#allocation17], %s797
        %s799 = sand.u32 %s271, 1
        %s800 = smul.addr %s799, 16
        %s801 = scalar_lea.vmem [#allocation16], %s800
        %p802 = pneg %p284
        %p803 = pneg %p281
        %p804 = scmp.lt.s32.totalorder %s48, 1
        %s805 = scalar_select %p804, %s48, 1
        %s806 = scalar_lea.vmem %s9, %s805
        %p807 = pneg %p310
        %p808 = pneg %p307
        %s809 = sand.u32 %s43, 1
        %s810 = scalar_lea.sflag [#allocation17], %s809
        %s811 = sand.u32 %s323, 1
        %s812 = smul.addr %s811, 16
        %s813 = scalar_lea.vmem [#allocation18], %s812
        %p814 = pneg %p336
        %p815 = pneg %p333
        %p816 = scmp.lt.s32.totalorder %s48, 1
        %s817 = scalar_select %p816, %s48, 1
        %s818 = scalar_lea.vmem %s11, %s817
        %p819 = pneg %p362
        %p820 = pneg %p359
        %s821 = sand.u32 %s375, 1
        %s822 = scalar_lea.sflag [#allocation20], %s821
        %s823 = sand.u32 %s375, 1
        %s824 = scalar_lea.vmem [#allocation19], %s823
        %p825 = pneg %p388
        %p826 = pneg %p385
        %p827 = scmp.lt.s32.totalorder %s48, 1
        %s828 = scalar_select %p827, %s48, 1
        %s829 = scalar_lea.vmem %s13, %s828
        %p830 = pneg %p414
        %p831 = pneg %p411
        %p832 = pneg %p442
        %p833 = pneg %p439
        %s834 = sand.u32 %s429, 1
        %s835 = scalar_lea.sflag [#allocation9], %s834
        %s836 = sand.u32 %s429, 1
        %s837 = smul.addr %s836, 16
        %s838 = scalar_lea.vmem [#allocation21], %s837
        %p839 = scmp.lt.s32.totalorder %s48, 1
        %s840 = scalar_select %p839, %s48, 1
        %s841 = scalar_lea.vmem %s3, %s840
        %p842 = scmp.lt.s32.totalorder %s48, 1
        %s843 = scalar_select %p842, %s48, 1
        %s844 = scalar_lea.vmem %s5, %s843
        %p845 = scmp.lt.s32.totalorder %s48, 1
        %s846 = scalar_select %p845, %s48, 1
        %s847 = scalar_lea.vmem %s7, %s846
        %p848 = scmp.lt.s32.totalorder %s48, 1
        %s849 = scalar_select %p848, %s48, 1
        %s850 = scalar_lea.vmem %s9, %s849
        %p851 = scmp.lt.s32.totalorder %s48, 1
        %s852 = scalar_select %p851, %s48, 1
        %s853 = scalar_lea.vmem %s11, %s852
        %p854 = scmp.lt.s32.totalorder %s48, 1
        %s855 = scalar_select %p854, %s48, 1
        %s856 = scalar_lea.vmem %s13, %s855
        %p858 = scmp.eq.s32.totalorder %s48, 0
        // Predicated region
        $region109: #{tpu_custom_call.1} parent=75 // pred_check
          %p859 = pneg %p858
        $region110: #{tpu_custom_call.1} parent=75 // pred_check_branch
          %861 = sbr.rel (%p859) target = $region112
        $region111: #{tpu_custom_call.1} parent=75 // pred_region
          %v862 = vld [vmem:[%s674] sm:$0xff]
          %v863 = vld [vmem:[%s674 + $0x8] sm:$0xff]
          %vm864 = vcmask 261120
          %865 = vst.msk [vmem:[#allocation2] sm:$0xff] %vm864, %v862
          %866 = vst.msk [vmem:[#allocation2 + $0x8] sm:$0xff] %vm864, %v863
        $region112: #{tpu_custom_call.1} parent=75 // pred_fallthru
          _
        %v867 = vld [vmem:[#allocation2] sm:$0xff]
        %v868 = vld [vmem:[#allocation2 + $0x8] sm:$0xff]
        %v869 = vpack.c.bf16 %v868, %v867
        %v870 = vld [vmem:[%s694] sm:$0xf]
        %v871 = vld [vmem:[%s694 + $0x4] sm:$0xf]
        %v872 = vld [vmem:[%s694 + $0x8] sm:$0xf]
        %v873 = vld [vmem:[%s694 + $0xc] sm:$0xf]
        %v874 = vld [vmem:[%s841] sm:$0x1]
        %v876 = vperm.slane %v874, 0
        %v882 = vunpack.c.l.b16 %v870
        %v883 = vunpack.c.l.b16 %v871
        %v884 = vunpack.c.l.b16 %v872
        %v885 = vunpack.c.l.b16 %v873
        %v886 = vpack.c.b16 %v883, %v882
        %v887 = vpack.c.b16 %v885, %v884
        %vm890 = vcmask 261120
        %v892 = vsel %vm890, %v869, 0
        %894 = vmatpush.bf16.msra.mxu0 0
        %895 = vmatpush.bf16.msra.mxu0 0
        %896 = vmatpush.bf16.msra.mxu0 0
        %897 = vmatpush.bf16.msra.mxu0 0
        %898 = vmatpush.bf16.msra.mxu0 0
        %899 = vmatpush.bf16.msra.mxu0 0
        %900 = vmatpush.bf16.msra.mxu0 %v887
        %901 = vmatpush.bf16.msra.mxu0 %v886
        %902 = vmatmul.bf16.gmra.mxu0 %v892
        %v903 = vpop.f32.mrf.mxu0
        %v904 = vadd.f32 %v876, %v903
        %v905 = vpop.f32.mrf.mxu0
        %v906 = vadd.f32 %v876, %v905
        %907 = vdwg.mxu0
        %v908 = vpack.c.bf16 %v904, %v904
        %v909 = vpack.c.bf16 %v906, %v906
        %vm910 = vcmask 60416
        %911 = vst.msk [vmem:[#allocation3] sm:$0xf] %vm910, %v908
        %912 = vst.msk [vmem:[#allocation3 + $0x4] sm:$0xf] %vm910, %v909
        %915 = vrot.lane.b32.xlu0 %v908, 96
        %v916 = vpop.permute.xlu0 %915
        %917 = vrot.lane.b32.xlu0 %v909, 96
        %v918 = vpop.permute.xlu0 %917
        %921 = vst.msk [vmem:[#allocation4] sm:$0xf] %vm910, %v916
        %922 = vst.msk [vmem:[#allocation4 + $0x4] sm:$0xf] %vm910, %v918
        %923 = vrot.lane.b32.xlu0 %v908, 64
        %v924 = vpop.permute.xlu0 %923
        %925 = vrot.lane.b32.xlu0 %v909, 64
        %v926 = vpop.permute.xlu0 %925
        %929 = vst.msk [vmem:[#allocation5] sm:$0xf] %vm910, %v924
        %930 = vst.msk [vmem:[#allocation5 + $0x4] sm:$0xf] %vm910, %v926
        %931 = vrot.lane.b32.xlu0 %v908, 120
        %v932 = vpop.permute.xlu0 %931
        %933 = vrot.lane.b32.xlu0 %v909, 120
        %v934 = vpop.permute.xlu0 %933
        %s937 = scalar_lea.vmem [#allocation3], 8
        %938 = vst.msk [vmem:[%s937] sm:$0xf] %vm910, %v932
        %939 = vst.msk [vmem:[%s937 + $0x4] sm:$0xf] %vm910, %v934
        %940 = vrot.lane.b32.xlu0 %v908, 88
        %v941 = vpop.permute.xlu0 %940
        %942 = vrot.lane.b32.xlu0 %v909, 88
        %v943 = vpop.permute.xlu0 %942
        %s946 = scalar_lea.vmem [#allocation4], 8
        %947 = vst.msk [vmem:[%s946] sm:$0xf] %vm910, %v941
        %948 = vst.msk [vmem:[%s946 + $0x4] sm:$0xf] %vm910, %v943
        %949 = vrot.lane.b32.xlu0 %v908, 56
        %v950 = vpop.permute.xlu0 %949
        %951 = vrot.lane.b32.xlu0 %v909, 56
        %v952 = vpop.permute.xlu0 %951
        %s955 = scalar_lea.vmem [#allocation5], 8
        %956 = vst.msk [vmem:[%s955] sm:$0xf] %vm910, %v950
        %957 = vst.msk [vmem:[%s955 + $0x4] sm:$0xf] %vm910, %v952
        %958 = vrot.lane.b32.xlu0 %v908, 112
        %v959 = vpop.permute.xlu0 %958
        %960 = vrot.lane.b32.xlu0 %v909, 112
        %v961 = vpop.permute.xlu0 %960
        %s964 = scalar_lea.vmem [#allocation3], 16
        %965 = vst.msk [vmem:[%s964] sm:$0xf] %vm910, %v959
        %966 = vst.msk [vmem:[%s964 + $0x4] sm:$0xf] %vm910, %v961
        %967 = vrot.lane.b32.xlu0 %v908, 80
        %v968 = vpop.permute.xlu0 %967
        %969 = vrot.lane.b32.xlu0 %v909, 80
        %v970 = vpop.permute.xlu0 %969
        %s973 = scalar_lea.vmem [#allocation4], 16
        %974 = vst.msk [vmem:[%s973] sm:$0xf] %vm910, %v968
        %975 = vst.msk [vmem:[%s973 + $0x4] sm:$0xf] %vm910, %v970
        %976 = vrot.lane.b32.xlu0 %v908, 48
        %v977 = vpop.permute.xlu0 %976
        %978 = vrot.lane.b32.xlu0 %v909, 48
        %v979 = vpop.permute.xlu0 %978
        %s982 = scalar_lea.vmem [#allocation5], 16
        %983 = vst.msk [vmem:[%s982] sm:$0xf] %vm910, %v977
        %984 = vst.msk [vmem:[%s982 + $0x4] sm:$0xf] %vm910, %v979
        %985 = vrot.lane.b32.xlu0 %v908, 104
        %v986 = vpop.permute.xlu0 %985
        %987 = vrot.lane.b32.xlu0 %v909, 104
        %v988 = vpop.permute.xlu0 %987
        %s991 = scalar_lea.vmem [#allocation3], 24
        %992 = vst.msk [vmem:[%s991] sm:$0xf] %vm910, %v986
        %993 = vst.msk [vmem:[%s991 + $0x4] sm:$0xf] %vm910, %v988
        %994 = vrot.lane.b32.xlu0 %v908, 72
        %v995 = vpop.permute.xlu0 %994
        %996 = vrot.lane.b32.xlu0 %v909, 72
        %v997 = vpop.permute.xlu0 %996
        %s1000 = scalar_lea.vmem [#allocation4], 24
        %1001 = vst.msk [vmem:[%s1000] sm:$0xf] %vm910, %v995
        %1002 = vst.msk [vmem:[%s1000 + $0x4] sm:$0xf] %vm910, %v997
        %1003 = vrot.lane.b32.xlu0 %v908, 40
        %v1004 = vpop.permute.xlu0 %1003
        %1005 = vrot.lane.b32.xlu0 %v909, 40
        %v1006 = vpop.permute.xlu0 %1005
        %s1009 = scalar_lea.vmem [#allocation5], 24
        %1010 = vst.msk [vmem:[%s1009] sm:$0xf] %vm910, %v1004
        %1011 = vst.msk [vmem:[%s1009 + $0x4] sm:$0xf] %vm910, %v1006
        %v1012 = vld [vmem:[#allocation3] sm:$0xf]
        %v1013 = vld [vmem:[#allocation3 + $0x4] sm:$0xf]
        %v1014 = vld [vmem:[#allocation3 + $0x8] sm:$0xf]
        %v1015 = vld [vmem:[#allocation3 + $0xc] sm:$0xf]
        %v1016 = vld [vmem:[#allocation3 + $0x10] sm:$0xf]
        %v1017 = vld [vmem:[#allocation3 + $0x14] sm:$0xf]
        %v1018 = vld [vmem:[#allocation3 + $0x18] sm:$0xf]
        %v1019 = vld [vmem:[#allocation3 + $0x1c] sm:$0xf]
        %v1020 = vld [vmem:[#allocation4] sm:$0xf]
        %v1021 = vld [vmem:[#allocation4 + $0x4] sm:$0xf]
        %v1022 = vld [vmem:[#allocation4 + $0x8] sm:$0xf]
        %v1023 = vld [vmem:[#allocation4 + $0xc] sm:$0xf]
        %v1024 = vld [vmem:[#allocation4 + $0x10] sm:$0xf]
        %v1025 = vld [vmem:[#allocation4 + $0x14] sm:$0xf]
        %v1026 = vld [vmem:[#allocation4 + $0x18] sm:$0xf]
        %v1027 = vld [vmem:[#allocation4 + $0x1c] sm:$0xf]
        %v1028 = vld [vmem:[#allocation5] sm:$0xf]
        %v1029 = vld [vmem:[#allocation5 + $0x4] sm:$0xf]
        %v1030 = vld [vmem:[#allocation5 + $0x8] sm:$0xf]
        %v1031 = vld [vmem:[#allocation5 + $0xc] sm:$0xf]
        %v1032 = vld [vmem:[#allocation5 + $0x10] sm:$0xf]
        %v1033 = vld [vmem:[#allocation5 + $0x14] sm:$0xf]
        %v1034 = vld [vmem:[#allocation5 + $0x18] sm:$0xf]
        %v1035 = vld [vmem:[#allocation5 + $0x1c] sm:$0xf]
        %v1036 = vld [vmem:[%s684] sm:$0xf]
        %v1037 = vld [vmem:[%s684 + $0x4] sm:$0xf]
        %v1038 = vld [vmem:[%s684 + $0x8] sm:$0xf]
        %v1039 = vld [vmem:[%s684 + $0xc] sm:$0xf]
        %v1040 = vld [vmem:[%s684 + $0x10] sm:$0xf]
        %v1041 = vld [vmem:[%s684 + $0x14] sm:$0xf]
        %v1042 = vld [vmem:[%s684 + $0x18] sm:$0xf]
        %v1043 = vld [vmem:[%s684 + $0x1c] sm:$0xf]
        %v1044 = vunpack.c.l.bf16 %v1036
        %v1045 = vunpack.c.l.bf16 %v1037
        %v1046 = vunpack.c.l.bf16 %v1038
        %v1047 = vunpack.c.l.bf16 %v1039
        %v1048 = vunpack.c.l.bf16 %v1040
        %v1049 = vunpack.c.l.bf16 %v1041
        %v1050 = vunpack.c.l.bf16 %v1042
        %v1051 = vunpack.c.l.bf16 %v1043
        %v1054 = vunpack.c.l.b16 %v1012
        %v1055 = vunpack.c.l.b16 %v1013
        %v1056 = vpack.c.b16 %v1055, %v1054
        %v1059 = vunpack.c.l.b16 %v1020
        %v1060 = vunpack.c.l.b16 %v1021
        %v1061 = vpack.c.b16 %v1060, %v1059
        %vm1062 = vcmask 64512
        %v1064 = vsel %vm1062, %v1056, 0
        %v1067 = vsel %vm1062, %v1061, 0
        %1069 = vmatpush.bf16.xpose.msra.mxu0 0
        %1070 = vmatpush.bf16.xpose.msra.mxu0 0
        %1071 = vmatpush.bf16.xpose.msra.mxu0 0
        %1072 = vmatpush.bf16.xpose.msra.mxu0 0
        %1073 = vmatpush.bf16.xpose.msra.mxu0 0
        %1074 = vmatpush.bf16.xpose.msra.mxu0 0
        %1075 = vmatpush.bf16.xpose.msra.mxu0 0
        %1076 = vmatpush.bf16.xpose.msra.mxu0 %v1067
        %1077 = vmatmul.bf16.gmra.mxu0 %v1064
        %v1078 = vpop.f32.mrf.mxu0
        %v1079 = vadd.f32 %v1044, %v1078
        %v1080 = vpop.f32.mrf.mxu0
        %v1081 = vadd.f32 %v1045, %v1080
        %1082 = vdwg.mxu0
        %v1085 = vunpack.c.l.b16 %v1014
        %v1086 = vunpack.c.l.b16 %v1015
        %v1087 = vpack.c.b16 %v1086, %v1085
        %v1090 = vunpack.c.l.b16 %v1022
        %v1091 = vunpack.c.l.b16 %v1023
        %v1092 = vpack.c.b16 %v1091, %v1090
        %v1094 = vsel %vm1062, %v1087, 0
        %v1097 = vsel %vm1062, %v1092, 0
        %1099 = vmatpush.bf16.xpose.msra.mxu0 0
        %1100 = vmatpush.bf16.xpose.msra.mxu0 0
        %1101 = vmatpush.bf16.xpose.msra.mxu0 0
        %1102 = vmatpush.bf16.xpose.msra.mxu0 0
        %1103 = vmatpush.bf16.xpose.msra.mxu0 0
        %1104 = vmatpush.bf16.xpose.msra.mxu0 0
        %1105 = vmatpush.bf16.xpose.msra.mxu0 0
        %1106 = vmatpush.bf16.xpose.msra.mxu0 %v1097
        %1107 = vmatmul.bf16.gmra.mxu0 %v1094
        %v1108 = vpop.f32.mrf.mxu0
        %v1109 = vadd.f32 %v1046, %v1108
        %v1110 = vpop.f32.mrf.mxu0
        %v1111 = vadd.f32 %v1047, %v1110
        %1112 = vdwg.mxu0
        %v1115 = vunpack.c.l.b16 %v1016
        %v1116 = vunpack.c.l.b16 %v1017
        %v1117 = vpack.c.b16 %v1116, %v1115
        %v1120 = vunpack.c.l.b16 %v1024
        %v1121 = vunpack.c.l.b16 %v1025
        %v1122 = vpack.c.b16 %v1121, %v1120
        %v1124 = vsel %vm1062, %v1117, 0
        %v1127 = vsel %vm1062, %v1122, 0
        %1129 = vmatpush.bf16.xpose.msra.mxu0 0
        %1130 = vmatpush.bf16.xpose.msra.mxu0 0
        %1131 = vmatpush.bf16.xpose.msra.mxu0 0
        %1132 = vmatpush.bf16.xpose.msra.mxu0 0
        %1133 = vmatpush.bf16.xpose.msra.mxu0 0
        %1134 = vmatpush.bf16.xpose.msra.mxu0 0
        %1135 = vmatpush.bf16.xpose.msra.mxu0 0
        %1136 = vmatpush.bf16.xpose.msra.mxu0 %v1127
        %1137 = vmatmul.bf16.gmra.mxu0 %v1124
        %v1138 = vpop.f32.mrf.mxu0
        %v1139 = vadd.f32 %v1048, %v1138
        %v1140 = vpop.f32.mrf.mxu0
        %v1141 = vadd.f32 %v1049, %v1140
        %1142 = vdwg.mxu0
        %v1145 = vunpack.c.l.b16 %v1018
        %v1146 = vunpack.c.l.b16 %v1019
        %v1147 = vpack.c.b16 %v1146, %v1145
        %v1150 = vunpack.c.l.b16 %v1026
        %v1151 = vunpack.c.l.b16 %v1027
        %v1152 = vpack.c.b16 %v1151, %v1150
        %v1154 = vsel %vm1062, %v1147, 0
        %v1157 = vsel %vm1062, %v1152, 0
        %1159 = vmatpush.bf16.xpose.msra.mxu0 0
        %1160 = vmatpush.bf16.xpose.msra.mxu0 0
        %1161 = vmatpush.bf16.xpose.msra.mxu0 0
        %1162 = vmatpush.bf16.xpose.msra.mxu0 0
        %1163 = vmatpush.bf16.xpose.msra.mxu0 0
        %1164 = vmatpush.bf16.xpose.msra.mxu0 0
        %1165 = vmatpush.bf16.xpose.msra.mxu0 0
        %1166 = vmatpush.bf16.xpose.msra.mxu0 %v1157
        %1167 = vmatmul.bf16.gmra.mxu0 %v1154
        %v1168 = vpop.f32.mrf.mxu0
        %v1169 = vadd.f32 %v1050, %v1168
        %v1170 = vpop.f32.mrf.mxu0
        %v1171 = vadd.f32 %v1051, %v1170
        %1172 = vdwg.mxu0
        %vm1173 = vcmask 130048
        %v1174 = vsel %vm1173, %v1079, -inf
        %1175 = vmax.xlane.f32.xlu0 %v1174
        %v1176 = vpop.xlane.xlu0 %1175
        %v1177 = vsel %vm1173, %v1081, -inf
        %1178 = vmax.xlane.f32.xlu0 %v1177
        %v1179 = vpop.xlane.xlu0 %1178
        %v1180 = vsel %vm1173, %v1109, -inf
        %1181 = vmax.xlane.f32.xlu0 %v1180
        %v1182 = vpop.xlane.xlu0 %1181
        %v1183 = vsel %vm1173, %v1111, -inf
        %1184 = vmax.xlane.f32.xlu0 %v1183
        %v1185 = vpop.xlane.xlu0 %1184
        %v1186 = vsel %vm1173, %v1139, -inf
        %1187 = vmax.xlane.f32.xlu0 %v1186
        %v1188 = vpop.xlane.xlu0 %1187
        %v1189 = vsel %vm1173, %v1141, -inf
        %1190 = vmax.xlane.f32.xlu0 %v1189
        %v1191 = vpop.xlane.xlu0 %1190
        %v1192 = vsel %vm1173, %v1169, -inf
        %1193 = vmax.xlane.f32.xlu0 %v1192
        %v1194 = vpop.xlane.xlu0 %1193
        %v1195 = vsel %vm1173, %v1171, -inf
        %1196 = vmax.xlane.f32.xlu0 %v1195
        %v1197 = vpop.xlane.xlu0 %1196
        %v1198 = vsub.f32 %v1079, %v1176
        %v1199 = vsub.f32 %v1081, %v1179
        %v1200 = vsub.f32 %v1109, %v1182
        %v1201 = vsub.f32 %v1111, %v1185
        %v1202 = vsub.f32 %v1139, %v1188
        %v1203 = vsub.f32 %v1141, %v1191
        %v1204 = vsub.f32 %v1169, %v1194
        %v1205 = vsub.f32 %v1171, %v1197
        %v1206 = vmul.f32 %v1198, 1.442695
        %v1207 = vpow.pop %v1206
        %v1208 = vmul.f32 %v1199, 1.442695
        %v1209 = vpow.pop %v1208
        %v1210 = vmul.f32 %v1200, 1.442695
        %v1211 = vpow.pop %v1210
        %v1212 = vmul.f32 %v1201, 1.442695
        %v1213 = vpow.pop %v1212
        %v1214 = vmul.f32 %v1202, 1.442695
        %v1215 = vpow.pop %v1214
        %v1216 = vmul.f32 %v1203, 1.442695
        %v1217 = vpow.pop %v1216
        %v1218 = vmul.f32 %v1204, 1.442695
        %v1219 = vpow.pop %v1218
        %v1220 = vmul.f32 %v1205, 1.442695
        %v1221 = vpow.pop %v1220
        %v1222 = vsel %vm1173, %v1207, 0.0
        %1223 = vadd.xlane.f32.xlu0 %v1222
        %v1224 = vpop.xlane.xlu0 %1223
        %v1225 = vsel %vm1173, %v1209, 0.0
        %1226 = vadd.xlane.f32.xlu0 %v1225
        %v1227 = vpop.xlane.xlu0 %1226
        %v1228 = vsel %vm1173, %v1211, 0.0
        %1229 = vadd.xlane.f32.xlu0 %v1228
        %v1230 = vpop.xlane.xlu0 %1229
        %v1231 = vsel %vm1173, %v1213, 0.0
        %1232 = vadd.xlane.f32.xlu0 %v1231
        %v1233 = vpop.xlane.xlu0 %1232
        %v1234 = vsel %vm1173, %v1215, 0.0
        %1235 = vadd.xlane.f32.xlu0 %v1234
        %v1236 = vpop.xlane.xlu0 %1235
        %v1237 = vsel %vm1173, %v1217, 0.0
        %1238 = vadd.xlane.f32.xlu0 %v1237
        %v1239 = vpop.xlane.xlu0 %1238
        %v1240 = vsel %vm1173, %v1219, 0.0
        %1241 = vadd.xlane.f32.xlu0 %v1240
        %v1242 = vpop.xlane.xlu0 %1241
        %v1243 = vsel %vm1173, %v1221, 0.0
        %1244 = vadd.xlane.f32.xlu0 %v1243
        %v1245 = vpop.xlane.xlu0 %1244
        %v1246 = vpack.c.bf16 %v1207, %v1207
        %v1247 = vpack.c.bf16 %v1209, %v1209
        %v1248 = vpack.c.bf16 %v1211, %v1211
        %v1249 = vpack.c.bf16 %v1213, %v1213
        %v1250 = vpack.c.bf16 %v1215, %v1215
        %v1251 = vpack.c.bf16 %v1217, %v1217
        %v1252 = vpack.c.bf16 %v1219, %v1219
        %v1253 = vpack.c.bf16 %v1221, %v1221
        %v1256 = vunpack.c.l.b16 %v1246
        %v1257 = vunpack.c.l.b16 %v1247
        %v1258 = vpack.c.b16 %v1257, %v1256
        %v1261 = vunpack.c.l.b16 %v1028
        %v1262 = vunpack.c.l.b16 %v1029
        %v1263 = vpack.c.b16 %v1262, %v1261
        %v1266 = vsel %vm1173, %v1258, 0
        %1268 = vmatpush.bf16.msra.mxu0 0
        %1269 = vmatpush.bf16.msra.mxu0 0
        %1270 = vmatpush.bf16.msra.mxu0 0
        %1271 = vmatpush.bf16.msra.mxu0 0
        %1272 = vmatpush.bf16.msra.mxu0 0
        %1273 = vmatpush.bf16.msra.mxu0 0
        %1274 = vmatpush.bf16.msra.mxu0 0
        %1275 = vmatpush.bf16.msra.mxu0 %v1263
        %1276 = vmatmul.bf16.gmra.mxu0 %v1266
        %v1277 = vpop.f32.mrf.mxu0
        %v1278 = vadd.f32 0.0, %v1277
        %v1279 = vpop.f32.mrf.mxu0
        %v1280 = vadd.f32 0.0, %v1279
        %1281 = vdwg.mxu0
        %v1284 = vunpack.c.l.b16 %v1248
        %v1285 = vunpack.c.l.b16 %v1249
        %v1286 = vpack.c.b16 %v1285, %v1284
        %v1289 = vunpack.c.l.b16 %v1030
        %v1290 = vunpack.c.l.b16 %v1031
        %v1291 = vpack.c.b16 %v1290, %v1289
        %v1294 = vsel %vm1173, %v1286, 0
        %1296 = vmatpush.bf16.msra.mxu0 0
        %1297 = vmatpush.bf16.msra.mxu0 0
        %1298 = vmatpush.bf16.msra.mxu0 0
        %1299 = vmatpush.bf16.msra.mxu0 0
        %1300 = vmatpush.bf16.msra.mxu0 0
        %1301 = vmatpush.bf16.msra.mxu0 0
        %1302 = vmatpush.bf16.msra.mxu0 0
        %1303 = vmatpush.bf16.msra.mxu0 %v1291
        %1304 = vmatmul.bf16.gmra.mxu0 %v1294
        %v1305 = vpop.f32.mrf.mxu0
        %v1306 = vadd.f32 0.0, %v1305
        %v1307 = vpop.f32.mrf.mxu0
        %v1308 = vadd.f32 0.0, %v1307
        %1309 = vdwg.mxu0
        %v1312 = vunpack.c.l.b16 %v1250
        %v1313 = vunpack.c.l.b16 %v1251
        %v1314 = vpack.c.b16 %v1313, %v1312
        %v1317 = vunpack.c.l.b16 %v1032
        %v1318 = vunpack.c.l.b16 %v1033
        %v1319 = vpack.c.b16 %v1318, %v1317
        %v1322 = vsel %vm1173, %v1314, 0
        %1324 = vmatpush.bf16.msra.mxu0 0
        %1325 = vmatpush.bf16.msra.mxu0 0
        %1326 = vmatpush.bf16.msra.mxu0 0
        %1327 = vmatpush.bf16.msra.mxu0 0
        %1328 = vmatpush.bf16.msra.mxu0 0
        %1329 = vmatpush.bf16.msra.mxu0 0
        %1330 = vmatpush.bf16.msra.mxu0 0
        %1331 = vmatpush.bf16.msra.mxu0 %v1319
        %1332 = vmatmul.bf16.gmra.mxu0 %v1322
        %v1333 = vpop.f32.mrf.mxu0
        %v1334 = vadd.f32 0.0, %v1333
        %v1335 = vpop.f32.mrf.mxu0
        %v1336 = vadd.f32 0.0, %v1335
        %1337 = vdwg.mxu0
        %v1340 = vunpack.c.l.b16 %v1252
        %v1341 = vunpack.c.l.b16 %v1253
        %v1342 = vpack.c.b16 %v1341, %v1340
        %v1345 = vunpack.c.l.b16 %v1034
        %v1346 = vunpack.c.l.b16 %v1035
        %v1347 = vpack.c.b16 %v1346, %v1345
        %v1350 = vsel %vm1173, %v1342, 0
        %1352 = vmatpush.bf16.msra.mxu0 0
        %1353 = vmatpush.bf16.msra.mxu0 0
        %1354 = vmatpush.bf16.msra.mxu0 0
        %1355 = vmatpush.bf16.msra.mxu0 0
        %1356 = vmatpush.bf16.msra.mxu0 0
        %1357 = vmatpush.bf16.msra.mxu0 0
        %1358 = vmatpush.bf16.msra.mxu0 0
        %1359 = vmatpush.bf16.msra.mxu0 %v1347
        %1360 = vmatmul.bf16.gmra.mxu0 %v1350
        %v1361 = vpop.f32.mrf.mxu0
        %v1362 = vadd.f32 0.0, %v1361
        %v1363 = vpop.f32.mrf.mxu0
        %v1364 = vadd.f32 0.0, %v1363
        %1365 = vdwg.mxu0
        %v1366 = vrcp.pop %v1224
        %v1367 = vrcp.pop %v1227
        %v1368 = vrcp.pop %v1230
        %v1369 = vrcp.pop %v1233
        %v1370 = vrcp.pop %v1236
        %v1371 = vrcp.pop %v1239
        %v1372 = vrcp.pop %v1242
        %v1373 = vrcp.pop %v1245
        %v1374 = vmul.f32 %v1278, %v1366
        %v1375 = vmul.f32 %v1280, %v1367
        %v1376 = vmul.f32 %v1306, %v1368
        %v1377 = vmul.f32 %v1308, %v1369
        %v1378 = vmul.f32 %v1334, %v1370
        %v1379 = vmul.f32 %v1336, %v1371
        %v1380 = vmul.f32 %v1362, %v1372
        %v1381 = vmul.f32 %v1364, %v1373
        %v1382 = vpack.c.bf16 %v1374, %v1374
        %v1383 = vpack.c.bf16 %v1375, %v1375
        %1384 = vst.msk [vmem:[#allocation6] sm:$0xf] %vm910, %v1382
        %1385 = vst.msk [vmem:[#allocation6 + $0x4] sm:$0xf] %vm910, %v1383
        %v1386 = vpack.c.bf16 %v1376, %v1376
        %v1387 = vpack.c.bf16 %v1377, %v1377
        %1390 = vrot.lane.b32.xlu0 %v1386, 8
        %v1391 = vpop.permute.xlu0 %1390
        %1392 = vrot.lane.b32.xlu0 %v1387, 8
        %v1393 = vpop.permute.xlu0 %1392
        %vm1396 = vcmask 126016
        %1397 = vst.msk [vmem:[#allocation6] sm:$0xf] %vm1396, %v1391
        %1398 = vst.msk [vmem:[#allocation6 + $0x4] sm:$0xf] %vm1396, %v1393
        %v1399 = vpack.c.bf16 %v1378, %v1378
        %v1400 = vpack.c.bf16 %v1379, %v1379
        %1403 = vrot.lane.b32.xlu0 %v1399, 16
        %v1404 = vpop.permute.xlu0 %1403
        %1405 = vrot.lane.b32.xlu0 %v1400, 16
        %v1406 = vpop.permute.xlu0 %1405
        %vm1409 = vcmask 191616
        %1410 = vst.msk [vmem:[#allocation6] sm:$0xf] %vm1409, %v1404
        %1411 = vst.msk [vmem:[#allocation6 + $0x4] sm:$0xf] %vm1409, %v1406
        %v1412 = vpack.c.bf16 %v1380, %v1380
        %v1413 = vpack.c.bf16 %v1381, %v1381
        %1416 = vrot.lane.b32.xlu0 %v1412, 24
        %v1417 = vpop.permute.xlu0 %1416
        %1418 = vrot.lane.b32.xlu0 %v1413, 24
        %v1419 = vpop.permute.xlu0 %1418
        %vm1422 = vcmask 257216
        %1423 = vst.msk [vmem:[#allocation6] sm:$0xf] %vm1422, %v1417
        %1424 = vst.msk [vmem:[#allocation6 + $0x4] sm:$0xf] %vm1422, %v1419
        %v1425 = vld [vmem:[#allocation6] sm:$0xf]
        %v1426 = vld [vmem:[#allocation6 + $0x4] sm:$0xf]
        %v1427 = vld [vmem:[%s704] sm:$0xf]
        %v1428 = vld [vmem:[%s704 + $0x4] sm:$0xf]
        %v1429 = vld [vmem:[%s704 + $0x8] sm:$0xf]
        %v1430 = vld [vmem:[%s704 + $0xc] sm:$0xf]
        %v1431 = vld [vmem:[%s844] sm:$0x1]
        %v1433 = vperm.slane %v1431, 0
        %v1437 = vunpack.c.l.b16 %v1425
        %v1438 = vunpack.c.l.b16 %v1426
        %v1439 = vpack.c.b16 %v1438, %v1437
        %v1444 = vunpack.c.l.b16 %v1427
        %v1445 = vunpack.c.l.b16 %v1428
        %v1446 = vunpack.c.l.b16 %v1429
        %v1447 = vunpack.c.l.b16 %v1430
        %v1448 = vpack.c.b16 %v1445, %v1444
        %v1449 = vpack.c.b16 %v1447, %v1446
        %v1453 = vsel %vm890, %v1439, 0
        %1455 = vmatpush.bf16.msra.mxu0 0
        %1456 = vmatpush.bf16.msra.mxu0 0
        %1457 = vmatpush.bf16.msra.mxu0 0
        %1458 = vmatpush.bf16.msra.mxu0 0
        %1459 = vmatpush.bf16.msra.mxu0 0
        %1460 = vmatpush.bf16.msra.mxu0 0
        %1461 = vmatpush.bf16.msra.mxu0 %v1449
        %1462 = vmatpush.bf16.msra.mxu0 %v1448
        %1463 = vmatmul.bf16.gmra.mxu0 %v1453
        %v1464 = vpop.f32.mrf.mxu0
        %v1465 = vadd.f32 %v1433, %v1464
        %v1466 = vpop.f32.mrf.mxu0
        %v1467 = vadd.f32 %v1433, %v1466
        %1468 = vdwg.mxu0
        %v1469 = vadd.f32 %v867, %v1465
        %v1470 = vadd.f32 %v868, %v1467
        %v1471 = vsel %vm890, %v1469, 0.0
        %1472 = vadd.xlane.f32.xlu0 %v1471
        %v1473 = vpop.xlane.xlu0 %1472
        %v1474 = vsel %vm890, %v1470, 0.0
        %1475 = vadd.xlane.f32.xlu0 %v1474
        %v1476 = vpop.xlane.xlu0 %1475
        %v1477 = vrcp.pop 32.0
        %v1478 = vmul.f32 32.0, %v1477
        %v1479 = vsub.f32 1.0, %v1478
        %v1480 = vmul.f32 %v1477, %v1479
        %v1481 = vadd.f32 %v1477, %v1480
        %vm1482 = vweird.f32 %v1477
        %v1483 = vsel %vm1482, %v1477, %v1481
        %v1484 = vmul.f32 %v1473, %v1483
        %v1485 = vmul.f32 %v1476, %v1483
        %v1486 = vsub.f32 %v1469, %v1484
        %v1487 = vsub.f32 %v1470, %v1485
        %v1488 = vmul.f32 %v1486, %v1486
        %v1489 = vmul.f32 %v1487, %v1487
        %v1490 = vsel %vm890, %v1488, 0.0
        %1491 = vadd.xlane.f32.xlu0 %v1490
        %v1492 = vpop.xlane.xlu0 %1491
        %v1493 = vsel %vm890, %v1489, 0.0
        %1494 = vadd.xlane.f32.xlu0 %v1493
        %v1495 = vpop.xlane.xlu0 %1494
        %v1496 = vmul.f32 %v1492, %v1483
        %v1497 = vmul.f32 %v1495, %v1483
        %v1498 = vadd.f32 %v1496, 1e-05
        %v1499 = vadd.f32 %v1497, 1e-05
        %v1500 = vrsqrt.pop %v1498
        %v1501 = vmul.f32 %v1500, %v1498
        %v1502 = vmul.f32 %v1501, %v1500
        %v1503 = vmul.f32 0.5, %v1502
        %v1504 = vsub.f32 1.5, %v1503
        %v1505 = vmul.f32 %v1500, %v1504
        %vm1506 = vweird.f32 %v1498
        %vm1507 = vweird.f32 %v1500
        %vm1508 = vmor %vm1506, %vm1507
        %v1509 = vsel %vm1508, %v1500, %v1505
        %v1510 = vrsqrt.pop %v1499
        %v1511 = vmul.f32 %v1510, %v1499
        %v1512 = vmul.f32 %v1511, %v1510
        %v1513 = vmul.f32 0.5, %v1512
        %v1514 = vsub.f32 1.5, %v1513
        %v1515 = vmul.f32 %v1510, %v1514
        %vm1516 = vweird.f32 %v1499
        %vm1517 = vweird.f32 %v1510
        %vm1518 = vmor %vm1516, %vm1517
        %v1519 = vsel %vm1518, %v1510, %v1515
        %v1520 = vmul.f32 %v1486, %v1509
        %v1521 = vmul.f32 %v1487, %v1519
        %v1522 = vld [vmem:[%s713] sm:$0x1]
        %v1524 = vperm.slane %v1522, 0
        %v1526 = vmul.f32 %v1520, %v1524
        %v1527 = vmul.f32 %v1521, %v1524
        %v1528 = vld [vmem:[%s847] sm:$0x1]
        %v1530 = vperm.slane %v1528, 0
        %v1532 = vadd.f32 %v1526, %v1530
        %v1533 = vadd.f32 %v1527, %v1530
        %v1534 = vpack.c.bf16 %v1533, %v1532
        %v1535 = vld [vmem:[%s723] sm:$0xf]
        %v1536 = vld [vmem:[%s723 + $0x4] sm:$0xf]
        %v1537 = vld [vmem:[%s723 + $0x8] sm:$0xf]
        %v1538 = vld [vmem:[%s723 + $0xc] sm:$0xf]
        %v1539 = vld [vmem:[%s850] sm:$0x1]
        %v1541 = vperm.slane %v1539, 0
        %v1547 = vunpack.c.l.b16 %v1535
        %v1548 = vunpack.c.l.b16 %v1536
        %v1549 = vunpack.c.l.b16 %v1537
        %v1550 = vunpack.c.l.b16 %v1538
        %v1551 = vpack.c.b16 %v1548, %v1547
        %v1552 = vpack.c.b16 %v1550, %v1549
        %v1556 = vsel %vm890, %v1534, 0
        %1558 = vmatpush.bf16.msra.mxu0 0
        %1559 = vmatpush.bf16.msra.mxu0 0
        %1560 = vmatpush.bf16.msra.mxu0 0
        %1561 = vmatpush.bf16.msra.mxu0 0
        %1562 = vmatpush.bf16.msra.mxu0 0
        %1563 = vmatpush.bf16.msra.mxu0 0
        %1564 = vmatpush.bf16.msra.mxu0 %v1552
        %1565 = vmatpush.bf16.msra.mxu0 %v1551
        %1566 = vmatmul.bf16.gmra.mxu0 %v1556
        %v1567 = vpop.f32.mrf.mxu0
        %v1568 = vadd.f32 %v1541, %v1567
        %v1569 = vpop.f32.mrf.mxu0
        %v1570 = vadd.f32 %v1541, %v1569
        %1571 = vdwg.mxu0
        %v1572 = vmul.f32 %v1568, %v1568
        %v1573 = vmul.f32 %v1570, %v1570
        %v1574 = vmul.f32 %v1568, %v1572
        %v1575 = vmul.f32 %v1570, %v1573
        %v1576 = vmul.f32 %v1574, 0.044715
        %v1577 = vmul.f32 %v1575, 0.044715
        %v1578 = vadd.f32 %v1568, %v1576
        %v1579 = vadd.f32 %v1570, %v1577
        %v1580 = vmul.f32 %v1578, 0.7978846
        %v1581 = vmul.f32 %v1579, 0.7978846
        %v1582 = vtanh.pop %v1580
        %v1583 = vtanh.pop %v1581
        %v1584 = vadd.f32 %v1582, 1.0
        %v1585 = vadd.f32 %v1583, 1.0
        %v1586 = vmul.f32 %v1584, 0.5
        %v1587 = vmul.f32 %v1585, 0.5
        %v1588 = vmul.f32 %v1568, %v1586
        %v1589 = vmul.f32 %v1570, %v1587
        %v1590 = vpack.c.bf16 %v1589, %v1588
        %v1591 = vld [vmem:[%s733] sm:$0xf]
        %v1592 = vld [vmem:[%s733 + $0x4] sm:$0xf]
        %v1593 = vld [vmem:[%s733 + $0x8] sm:$0xf]
        %v1594 = vld [vmem:[%s733 + $0xc] sm:$0xf]
        %v1595 = vld [vmem:[%s853] sm:$0x1]
        %v1597 = vperm.slane %v1595, 0
        %v1603 = vunpack.c.l.b16 %v1591
        %v1604 = vunpack.c.l.b16 %v1592
        %v1605 = vunpack.c.l.b16 %v1593
        %v1606 = vunpack.c.l.b16 %v1594
        %v1607 = vpack.c.b16 %v1604, %v1603
        %v1608 = vpack.c.b16 %v1606, %v1605
        %v1612 = vsel %vm890, %v1590, 0
        %1614 = vmatpush.bf16.msra.mxu0 0
        %1615 = vmatpush.bf16.msra.mxu0 0
        %1616 = vmatpush.bf16.msra.mxu0 0
        %1617 = vmatpush.bf16.msra.mxu0 0
        %1618 = vmatpush.bf16.msra.mxu0 0
        %1619 = vmatpush.bf16.msra.mxu0 0
        %1620 = vmatpush.bf16.msra.mxu0 %v1608
        %1621 = vmatpush.bf16.msra.mxu0 %v1607
        %1622 = vmatmul.bf16.gmra.mxu0 %v1612
        %v1623 = vpop.f32.mrf.mxu0
        %v1624 = vadd.f32 %v1597, %v1623
        %v1625 = vpop.f32.mrf.mxu0
        %v1626 = vadd.f32 %v1597, %v1625
        %1627 = vdwg.mxu0
        %v1628 = vadd.f32 %v1532, %v1624
        %v1629 = vadd.f32 %v1533, %v1626
        %v1630 = vsel %vm890, %v1628, 0.0
        %1631 = vadd.xlane.f32.xlu0 %v1630
        %v1632 = vpop.xlane.xlu0 %1631
        %v1633 = vsel %vm890, %v1629, 0.0
        %1634 = vadd.xlane.f32.xlu0 %v1633
        %v1635 = vpop.xlane.xlu0 %1634
        %v1636 = vmul.f32 %v1632, %v1483
        %v1637 = vmul.f32 %v1635, %v1483
        %v1638 = vsub.f32 %v1628, %v1636
        %v1639 = vsub.f32 %v1629, %v1637
        %v1640 = vmul.f32 %v1638, %v1638
        %v1641 = vmul.f32 %v1639, %v1639
        %v1642 = vsel %vm890, %v1640, 0.0
        %1643 = vadd.xlane.f32.xlu0 %v1642
        %v1644 = vpop.xlane.xlu0 %1643
        %v1645 = vsel %vm890, %v1641, 0.0
        %1646 = vadd.xlane.f32.xlu0 %v1645
        %v1647 = vpop.xlane.xlu0 %1646
        %v1648 = vmul.f32 %v1644, %v1483
        %v1649 = vmul.f32 %v1647, %v1483
        %v1650 = vadd.f32 %v1648, 1e-05
        %v1651 = vadd.f32 %v1649, 1e-05
        %v1652 = vrsqrt.pop %v1650
        %v1653 = vmul.f32 %v1652, %v1650
        %v1654 = vmul.f32 %v1653, %v1652
        %v1655 = vmul.f32 0.5, %v1654
        %v1656 = vsub.f32 1.5, %v1655
        %v1657 = vmul.f32 %v1652, %v1656
        %vm1658 = vweird.f32 %v1650
        %vm1659 = vweird.f32 %v1652
        %vm1660 = vmor %vm1658, %vm1659
        %v1661 = vsel %vm1660, %v1652, %v1657
        %v1662 = vrsqrt.pop %v1651
        %v1663 = vmul.f32 %v1662, %v1651
        %v1664 = vmul.f32 %v1663, %v1662
        %v1665 = vmul.f32 0.5, %v1664
        %v1666 = vsub.f32 1.5, %v1665
        %v1667 = vmul.f32 %v1662, %v1666
        %vm1668 = vweird.f32 %v1651
        %vm1669 = vweird.f32 %v1662
        %vm1670 = vmor %vm1668, %vm1669
        %v1671 = vsel %vm1670, %v1662, %v1667
        %v1672 = vmul.f32 %v1638, %v1661
        %v1673 = vmul.f32 %v1639, %v1671
        %v1674 = vld [vmem:[%s742] sm:$0x1]
        %v1676 = vperm.slane %v1674, 0
        %v1678 = vmul.f32 %v1672, %v1676
        %v1679 = vmul.f32 %v1673, %v1676
        %v1680 = vld [vmem:[%s856] sm:$0x1]
        %v1682 = vperm.slane %v1680, 0
        %v1684 = vadd.f32 %v1678, %v1682
        %v1685 = vadd.f32 %v1679, %v1682
        %1686 = vst.msk [vmem:[#allocation2] sm:$0xff] %vm890, %v1684
        %1687 = vst.msk [vmem:[#allocation2 + $0x8] sm:$0xff] %vm890, %v1685
        %1688 = vst.msk [vmem:[%s838] sm:$0xff] %vm890, %v1684
        %1689 = vst.msk [vmem:[%s838 + $0x8] sm:$0xff] %vm890, %v1685
        %s1690 = sand.u32 %s429, 1
        %s1691 = scalar_lea.sflag [#allocation9], %s1690
        %s1692 = sand.u32 %s429, 1
        %s1693 = smul.addr %s1692, 16
        %s1694 = scalar_lea.vmem [#allocation21], %s1693
        // Predicated region
        $region113: #{tpu_custom_call.1} parent=75 // pred_check
          %p1695 = pneg %p439
        $region114: #{tpu_custom_call.1} parent=75 // pred_check_branch
          %1697 = sbr.rel (%p1695) target = $region116
        $region115: #{tpu_custom_call.1} parent=75 // pred_region
          %1699 = vsyncadd %s1691, 0
          %s1700 = smul.addr %s48, 2
          %s1701 = smul.addr %s47, 4
          %s1702 = sadd.s32 %s1700, %s1701
          %s1703 = smul.addr %s1702, 8
          %s1704 = scalar_lea.hbm %s14, %s1703
          %s1705 = sshll.u32 %s1694, 4
          %s1706 = int_to_ptr.vmem [resolvable:$true] %s1705
          %s1707 = sshll.u32 %s1704, 4
          %s1708 = int_to_ptr.hbm [resolvable:$true] %s1707
          %1713 = dma.vmem_to_hbm [thread:$0]  %s1706, 256, %s1708, %s1691, 128, 128, 8
        $region116: #{tpu_custom_call.1} parent=75 // pred_fallthru
          _
      $region76: #{tpu_custom_call.1} parent=5 // pred_fallthru
        _
      %p1714 = scmp.le.s32.totalorder 2, %s38
      // Predicated region
      $region117: #{tpu_custom_call.1} parent=5 // pred_check
        %p1715 = pneg %p1714
      $region118: #{tpu_custom_call.1} parent=5 // pred_check_branch
        %1717 = sbr.rel (%p1715) target = $region120
      $region119: #{tpu_custom_call.1} parent=5 // pred_region
        %s1718 = ssub.s32 %s38, 2
        // Predicated region
        $region121: #{tpu_custom_call.1} parent=119 // pred_check
          %p1719 = pneg %p445
        $region122: #{tpu_custom_call.1} parent=119 // pred_check_branch
          %1721 = sbr.rel (%p1719) target = $region124
        $region123: #{tpu_custom_call.1} parent=119 // pred_region
          %s1722 = sand.u32 %s430, 1
          %s1723 = scalar_lea.sflag [#allocation9], %s1722
          %s1724 = sand.u32 %s430, 1
          %s1725 = smul.addr %s1724, 16
          %s1726 = scalar_lea.vmem [#allocation21], %s1725
          %1728 = dma.done %s1723, 256
        $region124: #{tpu_custom_call.1} parent=119 // pred_fallthru
          _
      $region120: #{tpu_custom_call.1} parent=5 // pred_fallthru
        _
    $region6: #{tpu_custom_call.1} parent=1 // loop_footer
      %s42 = sadd.s32 1, %s38
    $region7: #{tpu_custom_call.1} parent=1 // loop_footer_branch
      %37 = sbr.rel target = $region3
    $region8: #{tpu_custom_call.1} parent=1 // loop_exit
      _
    %1729 = vsyncpa [#allocation8], 1
    %s1730 = scalar_lea.sflag [#allocation8], 1
    %1731 = vsyncpa %s1730, 1
    %1732 = vsyncpa [#allocation11], 1
    %s1733 = scalar_lea.sflag [#allocation11], 1
    %1734 = vsyncpa %s1733, 1
    %1735 = vsyncpa [#allocation14], 1
    %s1736 = scalar_lea.sflag [#allocation14], 1
    %1737 = vsyncpa %s1736, 1
    %1738 = vsyncpa [#allocation17], 1
    %s1739 = scalar_lea.sflag [#allocation17], 1
    %1740 = vsyncpa %s1739, 1
    %1741 = vsyncpa [#allocation20], 1
    %s1742 = scalar_lea.sflag [#allocation20], 1
    %1743 = vsyncpa %s1742, 1
    %1744 = vsyncpa [#allocation9], 1
    %s1745 = scalar_lea.sflag [#allocation9], 1
    %1746 = vsyncpa %s1745, 1

</llo_original>
